<compile_context>
chip_gen: v6e
topology: v6e:2x2x1
jax: 0.10.0
libtpu: 0.0.40
codegen_flags: <defaults>
</compile_context>

<pallas_src>
import functools

import numpy as np

import jax
import jax.numpy as jnp
from jax import lax
from jax.experimental import pallas as pl
from jax.experimental.pallas import tpu as pltpu

_WIN = 17              # fused (stride-2 conv + 8^3 pool) input window extent per axis
_L = _WIN ** 3         # 4913 window elements per pooled output voxel
_POOL3 = 512           # 8*8*8 conv outputs averaged into each pooled voxel


# --------------------------------------------------------------------------- kernels
def _dwpool_pw_kernel(win_ref, eff_ref, bdw_ref, wpwT_ref, pw_ref):
    """Fused depthwise conv(3x3x3, s2, p1) + 8^3 avg-pool + pointwise 1x1x1 conv.

    win_ref:  (1, npt, Cin, 4913)  per pooled voxel: its 17^3 padded-input window
    eff_ref:  (Cin, 4913)          per-channel effective fused conv+pool kernel
    bdw_ref:  (1, Cin)             depthwise bias
    wpwT_ref: (Cin, Cout)          pointwise weight (transposed)
    pw_ref:   (1, npt, Cout)       un-normalized pooled pointwise output
    """
    win = win_ref[0]                                        # (npt, Cin, L)
    eff = eff_ref[...]                                      # (Cin, L)

    # depthwise conv + pool: one FMA per input element, exact f32 (VPU mult + lane reduce).
    pooled = jnp.sum(win * eff[None, :, :], axis=-1)        # (npt, Cin)
    pooled = pooled * (1.0 / _POOL3) + bdw_ref[...]         # (npt, Cin)

    # pointwise conv on the MXU (tiny, but keeps the VPU free at large Cin/Cout).
    pw = jnp.dot(pooled, wpwT_ref[...],
                 preferred_element_type=jnp.float32,
                 precision=lax.Precision.HIGHEST)           # (npt, Cout)
    pw_ref[0] = pw


def _inorm_relu_kernel(pw_ref, out_ref, *, eps):
    """InstanceNorm3d (affine=False, biased variance) + ReLU over one batch element."""
    pw = pw_ref[0]                                          # (Npool, Cout)
    mean = jnp.mean(pw, axis=0, keepdims=True)              # (1, Cout)
    ctr = pw - mean
    var = jnp.mean(ctr * ctr, axis=0, keepdims=True)
    out_ref[0] = jnp.maximum(ctr * lax.rsqrt(var + eps), 0.0)


# ------------------------------------------------------------------- wrapper helpers
def _axis_gather_matrix():
    """A[k, u] = 1 iff window offset u (0..16) is touched by kernel tap k of the
    stride-2 conv for one of the 8 pooled outputs along that axis (u = 2*a + k, a in [0,8))."""
    u = np.arange(_WIN)[None, :]
    k = np.arange(3)[:, None]
    a = u - k
    valid = (a % 2 == 0) & (a >= 0) & (a < 16)
    return jnp.asarray(valid.astype(np.float32))            # (3, 17)


def _effective_kernel(w_dw):
    """(Cin, 3, 3, 3) depthwise weights -> (Cin, 17^3) effective fused conv+pool kernel."""
    A = _axis_gather_matrix()
    eff = jnp.einsum('cdef,du,ev,ft->cuvt', w_dw, A, A, A)  # (Cin, 17, 17, 17)
    return eff.reshape(w_dw.shape[0], _L)


def _pooled_windows(x):
    """(B, Cin, D, H, W) -> (B, Npool, Cin, 17^3): per pooled voxel, its padded-input window.

    Pure layout: pad(1) + per-axis [non-overlapping 16-blocks ++ one halo plane] + transpose.
    Materialized size is (17/16)^3 ~ 1.2x of x (vs 3.375x for the old 27-tap im2col)."""
    B, C, D, H, W = x.shape
    Dp, Hp, Wp = D // 16, H // 16, W // 16
    xp = jnp.pad(x, ((0, 0), (0, 0), (1, 1), (1, 1), (1, 1)))

    def expand(a, axis, nb):
        # `a` has extent 16*nb + 2 along `axis`; windows are [16*p, 16*p + 17), p in [0, nb).
        main = lax.slice_in_dim(a, 0, 16 * nb, axis=axis)
        halo = lax.slice_in_dim(a, 16, 16 * nb + 1, stride=16, axis=axis)
        main = main.reshape(a.shape[:axis] + (nb, 16) + a.shape[axis + 1:])
        halo = halo.reshape(a.shape[:axis] + (nb, 1) + a.shape[axis + 1:])
        return jnp.concatenate([main, halo], axis=axis + 1)

    t = expand(xp, 2, Dp)                                   # (B, C, Dp, 17, H+2, W+2)
    t = expand(t, 4, Hp)                                    # (B, C, Dp, 17, Hp, 17, W+2)
    t = expand(t, 6, Wp)                                    # (B, C, Dp, 17, Hp, 17, Wp, 17)
    t = t.transpose(0, 2, 4, 6, 1, 3, 5, 7)                 # (B, Dp, Hp, Wp, C, 17, 17, 17)
    return t.reshape(B, Dp * Hp * Wp, C, _L)


def _pick_npool_tile(npool, cin, cap_bytes=6 * 1024 * 1024):
    """Largest pooled-voxel tile whose window block stays under cap_bytes so the
    double-buffered working set fits v7x's 64 MiB VMEM; partial tiles are multiples of 8."""
    per_voxel = cin * _L * 4
    if npool * per_voxel <= cap_bytes:
        return npool
    divisors = [d for d in range(8, npool, 8) if npool % d == 0]
    fitting = [d for d in divisors if d * per_voxel <= cap_bytes]
    if fitting:
        return max(fitting)
    return min(divisors) if divisors else npool


# --------------------------------------------------------------------------- wrapper
def efficient_conv3d_block_pallas(x, w_dw, b_dw, w_pw, *, eps=1e-3):
    """x:(B,Cin,D,H,W) f32; w_dw:(Cin,3,3,3); b_dw:(Cin,); w_pw:(Cout,Cin).
    Returns (B, Cout, D//16, H//16, W//16) f32 (EfficientConv3DBlock forward, norm='in')."""
    B, Cin, D, H, W = x.shape
    Cout = w_pw.shape[0]
    assert D % 16 == 0 and H % 16 == 0 and W % 16 == 0, "spatial dims must divide by 16"
    Dp, Hp, Wp = D // 16, H // 16, W // 16
    Npool = Dp * Hp * Wp

    win = _pooled_windows(x.astype(jnp.float32))            # (B, Npool, Cin, 4913)
    eff = _effective_kernel(w_dw.astype(jnp.float32))       # (Cin, 4913)
    bdw = b_dw.astype(jnp.float32).reshape(1, Cin)
    wpwT = w_pw.astype(jnp.float32).reshape(Cout, Cin).T    # (Cin, Cout)

    npt = _pick_npool_tile(Npool, Cin)
    n_ptiles = Npool // npt

    main_cost = pl.CostEstimate(
        flops=int(B * Npool * (2 * Cin * _L + 2 * Cin * Cout + 2 * Cin)),
        transcendentals=0,
        bytes_accessed=int(4 * (B * Npool * Cin * _L + Cin * _L + Cin
                                + Cin * Cout + B * Npool * Cout)),
    )

    pw = pl.pallas_call(
        _dwpool_pw_kernel,
        out_shape=jax.ShapeDtypeStruct((B, Npool, Cout), jnp.float32),
        grid=(B, n_ptiles),
        in_specs=[
            pl.BlockSpec((1, npt, Cin, _L), lambda b, p: (b, p, 0, 0)),
            pl.BlockSpec((Cin, _L), lambda b, p: (0, 0)),
            pl.BlockSpec((1, Cin), lambda b, p: (0, 0)),
            pl.BlockSpec((Cin, Cout), lambda b, p: (0, 0)),
        ],
        out_specs=pl.BlockSpec((1, npt, Cout), lambda b, p: (b, p, 0)),
        compiler_params=pltpu.CompilerParams(
            dimension_semantics=("parallel", "parallel"),
            vmem_limit_bytes=48 * 1024 * 1024,
        ),
        cost_estimate=main_cost,
    )(win, eff, bdw, wpwT)

    norm_cost = pl.CostEstimate(
        flops=int(6 * B * Npool * Cout),
        transcendentals=int(B * Cout),
        bytes_accessed=int(8 * B * Npool * Cout),
    )

    out = pl.pallas_call(
        functools.partial(_inorm_relu_kernel, eps=float(eps)),
        out_shape=jax.ShapeDtypeStruct((B, Npool, Cout), jnp.float32),
        grid=(B,),
        in_specs=[pl.BlockSpec((1, Npool, Cout), lambda b: (b, 0, 0))],
        out_specs=pl.BlockSpec((1, Npool, Cout), lambda b: (b, 0, 0)),
        compiler_params=pltpu.CompilerParams(dimension_semantics=("parallel",)),
        cost_estimate=norm_cost,
    )(pw)

    # (B, Npool, Cout) -> (B, Cout, Dp, Hp, Wp): negligible pure-layout epilogue.
    return out.transpose(0, 2, 1).reshape(B, Cout, Dp, Hp, Wp)


# ------------------------------------------------------------------------- reference
def efficient_conv3d_block_reference(x, w_dw, b_dw, w_pw, *, eps=1e-3):
    """Pure-JAX/XLA reference mirroring the PyTorch forward (norm='in' path)."""
    B, Cin, D, H, W = x.shape
    dw = lax.conv_general_dilated(
        x, w_dw.reshape(Cin, 1, 3, 3, 3),
        window_strides=(2, 2, 2), padding=((1, 1), (1, 1), (1, 1)),
        dimension_numbers=("NCDHW", "OIDHW", "NCDHW"),
        feature_group_count=Cin, precision=lax.Precision.HIGHEST)
    dw = dw + b_dw[None, :, None, None, None]
    pw = jnp.einsum("oc,bcdhw->bodhw", w_pw, dw, precision=lax.Precision.HIGHEST)

    def avgpool2(a):
        b, c, d, h, w = a.shape
        return a.reshape(b, c, d // 2, 2, h // 2, 2, w // 2, 2).mean(axis=(3, 5, 7))
    for _ in range(3):
        pw = avgpool2(pw)

    mean = pw.mean(axis=(2, 3, 4), keepdims=True)
    var = ((pw - mean) ** 2).mean(axis=(2, 3, 4), keepdims=True)
    y = (pw - mean) * lax.rsqrt(var + eps)
    return jnp.maximum(y, 0.0)


if __name__ == "__main__":
    # Small shapes consistent with the module: Cin=4, Cout=8, spatial 32 (divides by 16).
    B, Cin, Cout = 2, 4, 8
    D = H = W = 32

    key = jax.random.PRNGKey(0)
    kx, k1, k2, k3 = jax.random.split(key, 4)
    x = jax.random.normal(kx, (B, Cin, D, H, W), dtype=jnp.float32)
    w_dw = jax.random.normal(k1, (Cin, 3, 3, 3), dtype=jnp.float32) * 0.2   # depthwise weight
    b_dw = jax.random.normal(k2, (Cin,), dtype=jnp.float32) * 0.1           # depthwise bias
    w_pw = jax.random.normal(k3, (Cout, Cin), dtype=jnp.float32) * 0.3      # pointwise weight

    fwd = jax.jit(efficient_conv3d_block_pallas)
    out = jax.block_until_ready(fwd(x, w_dw, b_dw, w_pw))
    ref = jax.block_until_ready(efficient_conv3d_block_reference(x, w_dw, b_dw, w_pw))

    assert out.shape == (B, Cout, D // 16, H // 16, W // 16), out.shape
    max_err = float(jnp.max(jnp.abs(out - ref)))
    assert jnp.allclose(out, ref, atol=1e-4, rtol=1e-4), f"mismatch vs reference: {max_err}"

    print("KERNEL_OK")
</pallas_src>

<mosaic_0001>
module attributes {stable_mosaic.version = 11 : i64} {
  func.func @_dwpool_pw_kernel(%arg0: i32, %arg1: i32, %arg2: memref<1x8x4x4913xf32, #tpu.memory_space<vmem>>, %arg3: memref<4x4913xf32, #tpu.memory_space<vmem>>, %arg4: memref<1x4xf32, #tpu.memory_space<vmem>>, %arg5: memref<4x8xf32, #tpu.memory_space<vmem>>, %arg6: memref<1x8x8xf32, #tpu.memory_space<vmem>>) attributes {dimension_semantics = [#tpu.dimension_semantics<parallel>, #tpu.dimension_semantics<parallel>], iteration_bounds = array<i64: 2, 1>, scalar_prefetch = 0 : i64, scratch_operands = 0 : i64, tpu.core_type = #tpu.core_type<tc>, window_params = [{transform_indices = @transform_0, window_bounds = array<i64: 1, 8, 4, 4913>}, {pipeline_mode = #tpu.pipeline_mode<synchronous>, transform_indices = @transform_1, window_bounds = array<i64: 4, 4913>}, {pipeline_mode = #tpu.pipeline_mode<synchronous>, transform_indices = @transform_2, window_bounds = array<i64: 1, 4>}, {pipeline_mode = #tpu.pipeline_mode<synchronous>, transform_indices = @transform_3, window_bounds = array<i64: 4, 8>}, {transform_indices = @transform_4, window_bounds = array<i64: 1, 8, 8>}]} {
    %c0 = arith.constant 0 : index
    %c0_0 = arith.constant 0 : index
    %c0_1 = arith.constant 0 : index
    %c0_2 = arith.constant 0 : index
    %0 = vector.load %arg2[%c0, %c0_0, %c0_1, %c0_2] : memref<1x8x4x4913xf32, #tpu.memory_space<vmem>>, vector<1x8x4x4913xf32>
    %1 = vector.shape_cast %0 : vector<1x8x4x4913xf32> to vector<8x4x4913xf32>
    %c0_3 = arith.constant 0 : index
    %c0_4 = arith.constant 0 : index
    %2 = vector.load %arg3[%c0_3, %c0_4] : memref<4x4913xf32, #tpu.memory_space<vmem>>, vector<4x4913xf32>
    %3 = vector.shape_cast %2 : vector<4x4913xf32> to vector<1x4x4913xf32>
    %4 = vector.broadcast %3 : vector<1x4x4913xf32> to vector<8x4x4913xf32>
    %5 = arith.mulf %1, %4 : vector<8x4x4913xf32>
    %cst = arith.constant dense<0.000000e+00> : vector<8x4xf32>
    %6 = vector.multi_reduction <add>, %5, %cst [2] : vector<8x4x4913xf32> to vector<8x4xf32>
    %cst_5 = arith.constant 0.001953125 : f32
    %7 = vector.broadcast %cst_5 : f32 to vector<8x4xf32>
    %8 = arith.mulf %6, %7 : vector<8x4xf32>
    %c0_6 = arith.constant 0 : index
    %c0_7 = arith.constant 0 : index
    %9 = vector.load %arg4[%c0_6, %c0_7] : memref<1x4xf32, #tpu.memory_space<vmem>>, vector<1x4xf32>
    %10 = vector.broadcast %9 : vector<1x4xf32> to vector<8x4xf32>
    %11 = arith.addf %8, %10 : vector<8x4xf32>
    %c0_8 = arith.constant 0 : index
    %c0_9 = arith.constant 0 : index
    %12 = vector.load %arg5[%c0_8, %c0_9] : memref<4x8xf32, #tpu.memory_space<vmem>>, vector<4x8xf32>
    %cst_10 = arith.constant dense<0.000000e+00> : vector<8x8xf32>
    %13 = tpu.matmul %11, %12, %cst_10 {dimension_numbers = #tpu.dot_dimension_numbers<[1], [0], [0], [1], [0, 0, 1, 1], [], []>, precision = #tpu.contract_precision<fp32>} : vector<8x4xf32>, vector<4x8xf32>, vector<8x8xf32> -> vector<8x8xf32>
    %c0_11 = arith.constant 0 : index
    %c0_12 = arith.constant 0 : index
    %c0_13 = arith.constant 0 : index
    %14 = vector.load %arg6[%c0_11, %c0_12, %c0_13] : memref<1x8x8xf32, #tpu.memory_space<vmem>>, vector<1x8x8xf32>
    %15 = vector.shape_cast %14 : vector<1x8x8xf32> to vector<8x8xf32>
    %16 = vector.shape_cast %13 : vector<8x8xf32> to vector<1x8x8xf32>
    tpu.vector_store %arg6[%c0_11, %c0_12, %c0_13], %16 {strides = array<i32>} : memref<1x8x8xf32, #tpu.memory_space<vmem>>, vector<1x8x8xf32>,
    return
  }
  func.func @transform_0(%arg0: i32, %arg1: i32) -> (i32, i32, i32, i32) {
    %c0_i32 = arith.constant 0 : i32
    %c0_i32_0 = arith.constant 0 : i32
    %c0_i32_1 = arith.constant 0 : i32
    return %arg0, %arg1, %c0_i32, %c0_i32_0 : i32, i32, i32, i32
  }
  func.func @transform_1(%arg0: i32, %arg1: i32) -> (i32, i32) {
    %c0_i32 = arith.constant 0 : i32
    %c0_i32_0 = arith.constant 0 : i32
    %c0_i32_1 = arith.constant 0 : i32
    return %c0_i32, %c0_i32_0 : i32, i32
  }
  func.func @transform_2(%arg0: i32, %arg1: i32) -> (i32, i32) {
    %c0_i32 = arith.constant 0 : i32
    %c0_i32_0 = arith.constant 0 : i32
    %c0_i32_1 = arith.constant 0 : i32
    return %c0_i32, %c0_i32_0 : i32, i32
  }
  func.func @transform_3(%arg0: i32, %arg1: i32) -> (i32, i32) {
    %c0_i32 = arith.constant 0 : i32
    %c0_i32_0 = arith.constant 0 : i32
    %c0_i32_1 = arith.constant 0 : i32
    return %c0_i32, %c0_i32_0 : i32, i32
  }
  func.func @transform_4(%arg0: i32, %arg1: i32) -> (i32, i32, i32) {
    %c0_i32 = arith.constant 0 : i32
    %c0_i32_0 = arith.constant 0 : i32
    return %arg0, %arg1, %c0_i32 : i32, i32, i32
  }
}

module attributes {stable_mosaic.version = 11 : i64} {
  func.func @_inorm_relu_kernel(%arg0: i32, %arg1: memref<1x8x8xf32, #tpu.memory_space<vmem>>, %arg2: memref<1x8x8xf32, #tpu.memory_space<vmem>>) attributes {dimension_semantics = [#tpu.dimension_semantics<parallel>], iteration_bounds = array<i64: 2>, scalar_prefetch = 0 : i64, scratch_operands = 0 : i64, tpu.core_type = #tpu.core_type<tc>, window_params = [{transform_indices = @transform_0, window_bounds = array<i64: 1, 8, 8>}, {transform_indices = @transform_1, window_bounds = array<i64: 1, 8, 8>}]} {
    %c0 = arith.constant 0 : index
    %c0_0 = arith.constant 0 : index
    %c0_1 = arith.constant 0 : index
    %0 = vector.load %arg1[%c0, %c0_0, %c0_1] : memref<1x8x8xf32, #tpu.memory_space<vmem>>, vector<1x8x8xf32>
    %1 = vector.shape_cast %0 : vector<1x8x8xf32> to vector<8x8xf32>
    %cst = arith.constant dense<0.000000e+00> : vector<8xf32>
    %2 = vector.multi_reduction <add>, %1, %cst [0] : vector<8x8xf32> to vector<8xf32>
    %3 = vector.shape_cast %2 : vector<8xf32> to vector<1x8xf32>
    %cst_2 = arith.constant 8.000000e+00 : f32
    %4 = vector.broadcast %cst_2 : f32 to vector<1x8xf32>
    %5 = arith.divf %3, %4 : vector<1x8xf32>
    %6 = vector.broadcast %5 : vector<1x8xf32> to vector<8x8xf32>
    %7 = arith.subf %1, %6 : vector<8x8xf32>
    %8 = arith.mulf %7, %7 : vector<8x8xf32>
    %cst_3 = arith.constant dense<0.000000e+00> : vector<8xf32>
    %9 = vector.multi_reduction <add>, %8, %cst_3 [0] : vector<8x8xf32> to vector<8xf32>
    %10 = vector.shape_cast %9 : vector<8xf32> to vector<1x8xf32>
    %cst_4 = arith.constant 8.000000e+00 : f32
    %11 = vector.broadcast %cst_4 : f32 to vector<1x8xf32>
    %12 = arith.divf %10, %11 : vector<1x8xf32>
    %cst_5 = arith.constant 1.000000e-03 : f32
    %13 = vector.broadcast %cst_5 : f32 to vector<1x8xf32>
    %14 = arith.addf %12, %13 : vector<1x8xf32>
    %15 = math.rsqrt %14 : vector<1x8xf32>
    %16 = vector.broadcast %15 : vector<1x8xf32> to vector<8x8xf32>
    %17 = arith.mulf %7, %16 : vector<8x8xf32>
    %cst_6 = arith.constant 0.000000e+00 : f32
    %18 = vector.broadcast %cst_6 : f32 to vector<8x8xf32>
    %19 = arith.maximumf %17, %18 : vector<8x8xf32>
    %c0_7 = arith.constant 0 : index
    %c0_8 = arith.constant 0 : index
    %c0_9 = arith.constant 0 : index
    %20 = vector.load %arg2[%c0_7, %c0_8, %c0_9] : memref<1x8x8xf32, #tpu.memory_space<vmem>>, vector<1x8x8xf32>
    %21 = vector.shape_cast %20 : vector<1x8x8xf32> to vector<8x8xf32>
    %22 = vector.shape_cast %19 : vector<8x8xf32> to vector<1x8x8xf32>
    tpu.vector_store %arg2[%c0_7, %c0_8, %c0_9], %22 {strides = array<i32>} : memref<1x8x8xf32, #tpu.memory_space<vmem>>, vector<1x8x8xf32>,
    return
  }
  func.func @transform_0(%arg0: i32) -> (i32, i32, i32) {
    %c0_i32 = arith.constant 0 : i32
    %c0_i32_0 = arith.constant 0 : i32
    %c0_i32_1 = arith.constant 0 : i32
    return %arg0, %c0_i32, %c0_i32_0 : i32, i32, i32
  }
  func.func @transform_1(%arg0: i32) -> (i32, i32, i32) {
    %c0_i32 = arith.constant 0 : i32
    %c0_i32_0 = arith.constant 0 : i32
    %c0_i32_1 = arith.constant 0 : i32
    return %arg0, %c0_i32, %c0_i32_0 : i32, i32, i32
  }
}

</mosaic_0001>

<llo_original>
// kernel: efficient_conv3d_block_pallas.3
$region0: #{efficient_conv3d_block_pallas.3}
  #allocation0 [shape = 'u32[]', space=smem, size = 0x4, offset = 0x4, fixed_abs, tag = 'smem constant byte address 0x4 - core index']
  #allocation1 [shape = 'u32[144,128]{1,0:T(1,128)}', space=vmem, size = 0x12000, scoped, tag = 'internal scratch']
  %s0 = inlined_call_operand.vmem [shape: f32[2,8,8], index: 0, kind: input, shape index: {}]
  %s1 = inlined_call_operand.hbm [shape: f32[2,8,8], index: 1, kind: output, shape index: {}]
  %s2 = sld [smem:[#allocation0]]
  $region37: #{efficient_conv3d_block_pallas.3} parent=0
    _
  %s4 = ssub.s32 1, %s2
  %s5 = scalar_select 0, %s4, %s2
  $region1: #{efficient_conv3d_block_pallas.3} parent=0
    #allocation2 [shape = 'u8[8192]{0}', space=vmem, size = 0x2000, scoped, tag = 'output window, operand 0']
    #allocation3 [shape = 's32[2]{0}', space=sflag, size = 0x8, scoped, tag = 'scoped memory for efficient_conv3d_block_pallas.3']
    %6 = vsyncpa [#allocation3], 0
    %s7 = scalar_lea.sflag [#allocation3], 1
    %8 = vsyncpa %s7, 0
    loop: start=0, step=1, limit=4
    $region2: #{efficient_conv3d_block_pallas.3} parent=1 // loop_pre_header
      _
    $region3: #{efficient_conv3d_block_pallas.3} parent=1 // loop_header
      %s10 = sphi 0, %s14
      %p11 = scmp.ge.s32.totalorder %s10, 4
      %s20 = sphi 0, %s22
      %s23 = sphi 0, %s20
      %s24 = sphi 0, %s23
      %s40 = sphi 0, %s24
      %s46 = sphi 0, %s48
      %s49 = sphi 0, %s46
      %s50 = sphi 0, %s49
      %s66 = sphi 0, %s50
    $region4: #{efficient_conv3d_block_pallas.3} parent=1 // loop_header_branch
      %13 = sbr.rel (%p11) target = $region8
    $region5: #{efficient_conv3d_block_pallas.3} parent=1 // loop_body
      %s15 = ssub.s32 %s10, 1
      %s16 = ssub.s32 %s10, 2
      %s17 = sadd.s32 %s10, 1
      %s18 = ssub.s32 %s10, %s17
      %p19 = scmp.eq.s32.totalorder %s18, 0
      %s21 = sadd.s32 %s20, 1
      %s22 = scalar_select %p19, %s20, %s21
      %p25 = pneg %p19
      %p26 = scmp.eq.s32.totalorder %s10, 1
      %p27 = por %p25, %p26
      %p28 = scmp.ne.s32.totalorder %s20, %s23
      %p29 = scmp.eq.s32.totalorder %s10, 0
      %p30 = por %p28, %p29
      %p31 = scmp.ne.s32.totalorder %s20, %s23
      %p32 = scmp.eq.s32.totalorder %s15, 1
      %p33 = por %p31, %p32
      %p34 = scmp.ne.s32.totalorder %s23, %s24
      %p35 = scmp.eq.s32.totalorder %s15, 0
      %p36 = por %p34, %p35
      %p37 = scmp.ne.s32.totalorder %s23, %s24
      %p38 = scmp.eq.s32.totalorder %s16, 1
      %p39 = por %p37, %p38
      %p41 = scmp.ne.s32.totalorder %s24, %s40
      %p42 = scmp.eq.s32.totalorder %s16, 0
      %p43 = por %p41, %p42
      %s44 = ssub.s32 %s10, %s17
      %p45 = scmp.eq.s32.totalorder %s44, 0
      %s47 = sadd.s32 %s46, 1
      %s48 = scalar_select %p45, %s46, %s47
      %p51 = pneg %p45
      %p52 = scmp.eq.s32.totalorder %s10, 1
      %p53 = por %p51, %p52
      %p54 = scmp.ne.s32.totalorder %s46, %s49
      %p55 = scmp.eq.s32.totalorder %s10, 0
      %p56 = por %p54, %p55
      %p57 = scmp.ne.s32.totalorder %s46, %s49
      %p58 = scmp.eq.s32.totalorder %s15, 1
      %p59 = por %p57, %p58
      %p60 = scmp.ne.s32.totalorder %s49, %s50
      %p61 = scmp.eq.s32.totalorder %s15, 0
      %p62 = por %p60, %p61
      %p63 = scmp.ne.s32.totalorder %s49, %s50
      %p64 = scmp.eq.s32.totalorder %s16, 1
      %p65 = por %p63, %p64
      %p67 = scmp.ne.s32.totalorder %s50, %s66
      %p68 = scmp.eq.s32.totalorder %s16, 0
      %p69 = por %p67, %p68
      %p70 = scmp.le.s32.totalorder 1, %s10
      %p71 = scmp.lt.s32.totalorder %s10, 3
      %p72 = pnand %p70, %p71
      %p73 = pneg %p72
      // Predicated region
      $region9: #{efficient_conv3d_block_pallas.3} parent=5 // pred_check
        _
      $region10: #{efficient_conv3d_block_pallas.3} parent=5 // pred_check_branch
        %75 = sbr.rel (%p72) target = $region12
      $region11: #{efficient_conv3d_block_pallas.3} parent=5 // pred_region
        %s76 = ssub.s32 %s10, 1
      $region12: #{efficient_conv3d_block_pallas.3} parent=5 // pred_fallthru
        _
      %p77 = scmp.lt.s32.totalorder %s10, 2
      // Predicated region
      $region13: #{efficient_conv3d_block_pallas.3} parent=5 // pred_check
        %p78 = pneg %p77
      $region14: #{efficient_conv3d_block_pallas.3} parent=5 // pred_check_branch
        %80 = sbr.rel (%p78) target = $region16
      $region15: #{efficient_conv3d_block_pallas.3} parent=5 // pred_region
        // Predicated region
        $region17: #{efficient_conv3d_block_pallas.3} parent=15 // pred_check
          %p81 = pneg %p30
        $region18: #{efficient_conv3d_block_pallas.3} parent=15 // pred_check_branch
          %83 = sbr.rel (%p81) target = $region20
        $region19: #{efficient_conv3d_block_pallas.3} parent=15 // pred_region
          %p84 = scmp.lt.s32.totalorder %s10, 1
          %s85 = scalar_select %p84, %s10, 1
          %s86 = smul.addr %s85, 8
          %s87 = scalar_lea.vmem %s0, %s86
        $region20: #{efficient_conv3d_block_pallas.3} parent=15 // pred_fallthru
          _
      $region16: #{efficient_conv3d_block_pallas.3} parent=5 // pred_fallthru
        _
      %p88 = scmp.le.s32.totalorder 1, %s10
      %p89 = scmp.lt.s32.totalorder %s10, 3
      %p90 = pnand %p88, %p89
      %p91 = pneg %p90
      // Predicated region
      $region21: #{efficient_conv3d_block_pallas.3} parent=5 // pred_check
        _
      $region22: #{efficient_conv3d_block_pallas.3} parent=5 // pred_check_branch
        %93 = sbr.rel (%p90) target = $region24
      $region23: #{efficient_conv3d_block_pallas.3} parent=5 // pred_region
        %s94 = ssub.s32 %s10, 1
        %p95 = scmp.lt.s32.totalorder %s15, 1
        %s96 = scalar_select %p95, %s15, 1
        %s97 = smul.addr %s96, 8
        %s98 = scalar_lea.vmem %s0, %s97
        %p99 = pneg %p36
        %p100 = pneg %p33
        %p101 = pneg %p62
        %p102 = pneg %p59
        %s103 = sand.u32 %s49, 1
        %s104 = scalar_lea.sflag [#allocation3], %s103
        %s105 = sand.u32 %s49, 1
        %s106 = smul.addr %s105, 8
        %s107 = scalar_lea.vmem [#allocation2], %s106
        %p108 = scmp.lt.s32.totalorder %s15, 1
        %s109 = scalar_select %p108, %s15, 1
        %s110 = smul.addr %s109, 8
        %s111 = scalar_lea.vmem %s0, %s110
        %v112 = vld [vmem:[%s111] sm:$0xff]
        %vm113 = vcmask 64512
        %v114 = vsel %vm113, %v112, 0.0
        %v115 = vrot.slane %v114, 4
        %v116 = vadd.f32 %v114, %v115
        %v117 = vrot.slane %v116, 2
        %v118 = vadd.f32 %v116, %v117
        %v119 = vrot.slane %v118, 1
        %v120 = vadd.f32 %v118, %v119
        %v121 = vrcp.pop 8.0
        %v122 = vmul.f32 %v120, %v121
        %v123 = vsub.f32 %v112, %v122
        %v124 = vmul.f32 %v123, %v123
        %v125 = vsel %vm113, %v124, 0.0
        %v126 = vrot.slane %v125, 4
        %v127 = vadd.f32 %v125, %v126
        %v128 = vrot.slane %v127, 2
        %v129 = vadd.f32 %v127, %v128
        %v130 = vrot.slane %v129, 1
        %v131 = vadd.f32 %v129, %v130
        %v132 = vmul.f32 %v131, %v121
        %v133 = vadd.f32 %v132, 0.001
        %v134 = vrsqrt.pop %v133
        %v135 = vmul.f32 %v123, %v134
        %v136 = vmax.f32 %v135, 0.0
        %137 = vst.msk [vmem:[%s107] sm:$0xff] %vm113, %v136
        %s138 = sand.u32 %s49, 1
        %s139 = scalar_lea.sflag [#allocation3], %s138
        %s140 = sand.u32 %s49, 1
        %s141 = smul.addr %s140, 8
        %s142 = scalar_lea.vmem [#allocation2], %s141
        // Predicated region
        $region25: #{efficient_conv3d_block_pallas.3} parent=23 // pred_check
          %p143 = pneg %p59
        $region26: #{efficient_conv3d_block_pallas.3} parent=23 // pred_check_branch
          %145 = sbr.rel (%p143) target = $region28
        $region27: #{efficient_conv3d_block_pallas.3} parent=23 // pred_region
          %s147 = ssub.s32 128, 128
          %148 = vsyncadd %s139, %s147
          %s149 = smul.addr %s15, 128
          %s150 = scalar_lea.hbm %s1, %s149
          %s152 = sshll.u32 %s142, 4
          %s153 = int_to_ptr.vmem [resolvable:$true] %s152
          %155 = dma.vmem_to_hbm [thread:$0]  %s153, 128, %s150, %s139
        $region28: #{efficient_conv3d_block_pallas.3} parent=23 // pred_fallthru
          _
      $region24: #{efficient_conv3d_block_pallas.3} parent=5 // pred_fallthru
        _
      %p156 = scmp.le.s32.totalorder 2, %s10
      // Predicated region
      $region29: #{efficient_conv3d_block_pallas.3} parent=5 // pred_check
        %p157 = pneg %p156
      $region30: #{efficient_conv3d_block_pallas.3} parent=5 // pred_check_branch
        %159 = sbr.rel (%p157) target = $region32
      $region31: #{efficient_conv3d_block_pallas.3} parent=5 // pred_region
        %s160 = ssub.s32 %s10, 2
        // Predicated region
        $region33: #{efficient_conv3d_block_pallas.3} parent=31 // pred_check
          %p161 = pneg %p65
        $region34: #{efficient_conv3d_block_pallas.3} parent=31 // pred_check_branch
          %163 = sbr.rel (%p161) target = $region36
        $region35: #{efficient_conv3d_block_pallas.3} parent=31 // pred_region
          %s164 = sand.u32 %s50, 1
          %s165 = scalar_lea.sflag [#allocation3], %s164
          %s166 = sand.u32 %s50, 1
          %s167 = smul.addr %s166, 8
          %s168 = scalar_lea.vmem [#allocation2], %s167
          %169 = dma.done %s165, 128
        $region36: #{efficient_conv3d_block_pallas.3} parent=31 // pred_fallthru
          _
      $region32: #{efficient_conv3d_block_pallas.3} parent=5 // pred_fallthru
        _
    $region6: #{efficient_conv3d_block_pallas.3} parent=1 // loop_footer
      %s14 = sadd.s32 1, %s10
    $region7: #{efficient_conv3d_block_pallas.3} parent=1 // loop_footer_branch
      %9 = sbr.rel target = $region3
    $region8: #{efficient_conv3d_block_pallas.3} parent=1 // loop_exit
      _
    %170 = vsyncpa [#allocation3], 1
    %s171 = scalar_lea.sflag [#allocation3], 1
    %172 = vsyncpa %s171, 1

// kernel: efficient_conv3d_block_pallas.2
$region0: #{efficient_conv3d_block_pallas.2}
  #allocation0 [shape = 'u32[]', space=smem, size = 0x4, offset = 0x4, fixed_abs, tag = 'smem constant byte address 0x4 - core index']
  #allocation1 [shape = 'u32[144,128]{1,0:T(1,128)}', space=vmem, size = 0x12000, scoped, tag = 'internal scratch']
  %s0 = inlined_call_operand.vmem [shape: f32[2,8,4,4913], index: 0, kind: input, shape index: {}]
  %s1 = inlined_call_operand.vmem [shape: f32[4,4913], index: 1, kind: input, shape index: {}]
  %s2 = inlined_call_operand.vmem [shape: f32[1,4], index: 2, kind: input, shape index: {}]
  %s3 = inlined_call_operand.vmem [shape: f32[4,8], index: 3, kind: input, shape index: {}]
  %s4 = inlined_call_operand.vmem [shape: f32[2,8,8], index: 4, kind: output, shape index: {}]
  %s5 = sld [smem:[#allocation0]]
  $region49: #{efficient_conv3d_block_pallas.2} parent=0
    _
  %s7 = ssub.s32 1, %s5
  %s8 = scalar_select 0, %s7, %s5
  loop: start=0, step=1, limit=4
  $region2: #{efficient_conv3d_block_pallas.2} parent=0 // loop_pre_header
    _
  $region3: #{efficient_conv3d_block_pallas.2} parent=0 // loop_header
    %s10 = sphi 0, %s14
    %p11 = scmp.ge.s32.totalorder %s10, 4
    %s17 = sphi 0, %s29
    %s18 = sphi 0, %s25
    %s19 = sphi 0, %s17
    %s20 = sphi 0, %s18
    %s21 = sphi 0, %s19
    %s22 = sphi 0, %s20
    %s34 = sphi 0, %s36
    %s37 = sphi 0, %s34
    %s38 = sphi 0, %s37
    %s54 = sphi 0, %s38
    %s58 = sphi 0, %s58
    %s60 = sphi 0, %s58
    %s61 = sphi 0, %s60
    %s75 = sphi 0, %s61
    %s79 = sphi 0, %s79
    %s81 = sphi 0, %s79
    %s82 = sphi 0, %s81
    %s96 = sphi 0, %s82
    %s100 = sphi 0, %s100
    %s102 = sphi 0, %s100
    %s103 = sphi 0, %s102
    %s117 = sphi 0, %s103
    %s125 = sphi 0, %s127
    %s128 = sphi 0, %s125
    %s129 = sphi 0, %s128
    %s145 = sphi 0, %s129
  $region4: #{efficient_conv3d_block_pallas.2} parent=0 // loop_header_branch
    %13 = sbr.rel (%p11) target = $region8
  $region5: #{efficient_conv3d_block_pallas.2} parent=0 // loop_body
    %s15 = ssub.s32 %s10, 1
    %s16 = ssub.s32 %s10, 2
    %s23 = sadd.s32 1, %s18
    %p24 = scmp.ge.s32.totalorder %s23, 1
    %s25 = scalar_select %p24, 0, %s23
    %s26 = sadd.s32 1, %s17
    %s27 = scalar_select %p24, %s26, %s17
    %p28 = scmp.ge.s32.totalorder %s27, 2
    %s29 = scalar_select %p28, 0, %s27
    %s30 = ssub.s32 %s17, %s29
    %s31 = ssub.s32 %s18, %s25
    %s32 = sor.u32 %s30, %s31
    %p33 = scmp.eq.s32.totalorder %s32, 0
    %s35 = sadd.s32 %s34, 1
    %s36 = scalar_select %p33, %s34, %s35
    %p39 = pneg %p33
    %p40 = scmp.eq.s32.totalorder %s10, 1
    %p41 = por %p39, %p40
    %p42 = scmp.ne.s32.totalorder %s34, %s37
    %p43 = scmp.eq.s32.totalorder %s10, 0
    %p44 = por %p42, %p43
    %p45 = scmp.ne.s32.totalorder %s34, %s37
    %p46 = scmp.eq.s32.totalorder %s15, 1
    %p47 = por %p45, %p46
    %p48 = scmp.ne.s32.totalorder %s37, %s38
    %p49 = scmp.eq.s32.totalorder %s15, 0
    %p50 = por %p48, %p49
    %p51 = scmp.ne.s32.totalorder %s37, %s38
    %p52 = scmp.eq.s32.totalorder %s16, 1
    %p53 = por %p51, %p52
    %p55 = scmp.ne.s32.totalorder %s38, %s54
    %p56 = scmp.eq.s32.totalorder %s16, 0
    %p57 = por %p55, %p56
    %s59 = sadd.s32 %s58, 1
    %p62 = scmp.eq.s32.totalorder %s10, 1
    %p63 = scmp.ne.s32.totalorder %s58, %s60
    %p64 = scmp.eq.s32.totalorder %s10, 0
    %p65 = por %p63, %p64
    %p66 = scmp.ne.s32.totalorder %s58, %s60
    %p67 = scmp.eq.s32.totalorder %s15, 1
    %p68 = por %p66, %p67
    %p69 = scmp.ne.s32.totalorder %s60, %s61
    %p70 = scmp.eq.s32.totalorder %s15, 0
    %p71 = por %p69, %p70
    %p72 = scmp.ne.s32.totalorder %s60, %s61
    %p73 = scmp.eq.s32.totalorder %s16, 1
    %p74 = por %p72, %p73
    %p76 = scmp.ne.s32.totalorder %s61, %s75
    %p77 = scmp.eq.s32.totalorder %s16, 0
    %p78 = por %p76, %p77
    %s80 = sadd.s32 %s79, 1
    %p83 = scmp.eq.s32.totalorder %s10, 1
    %p84 = scmp.ne.s32.totalorder %s79, %s81
    %p85 = scmp.eq.s32.totalorder %s10, 0
    %p86 = por %p84, %p85
    %p87 = scmp.ne.s32.totalorder %s79, %s81
    %p88 = scmp.eq.s32.totalorder %s15, 1
    %p89 = por %p87, %p88
    %p90 = scmp.ne.s32.totalorder %s81, %s82
    %p91 = scmp.eq.s32.totalorder %s15, 0
    %p92 = por %p90, %p91
    %p93 = scmp.ne.s32.totalorder %s81, %s82
    %p94 = scmp.eq.s32.totalorder %s16, 1
    %p95 = por %p93, %p94
    %p97 = scmp.ne.s32.totalorder %s82, %s96
    %p98 = scmp.eq.s32.totalorder %s16, 0
    %p99 = por %p97, %p98
    %s101 = sadd.s32 %s100, 1
    %p104 = scmp.eq.s32.totalorder %s10, 1
    %p105 = scmp.ne.s32.totalorder %s100, %s102
    %p106 = scmp.eq.s32.totalorder %s10, 0
    %p107 = por %p105, %p106
    %p108 = scmp.ne.s32.totalorder %s100, %s102
    %p109 = scmp.eq.s32.totalorder %s15, 1
    %p110 = por %p108, %p109
    %p111 = scmp.ne.s32.totalorder %s102, %s103
    %p112 = scmp.eq.s32.totalorder %s15, 0
    %p113 = por %p111, %p112
    %p114 = scmp.ne.s32.totalorder %s102, %s103
    %p115 = scmp.eq.s32.totalorder %s16, 1
    %p116 = por %p114, %p115
    %p118 = scmp.ne.s32.totalorder %s103, %s117
    %p119 = scmp.eq.s32.totalorder %s16, 0
    %p120 = por %p118, %p119
    %s121 = ssub.s32 %s17, %s29
    %s122 = ssub.s32 %s18, %s25
    %s123 = sor.u32 %s121, %s122
    %p124 = scmp.eq.s32.totalorder %s123, 0
    %s126 = sadd.s32 %s125, 1
    %s127 = scalar_select %p124, %s125, %s126
    %p130 = pneg %p124
    %p131 = scmp.eq.s32.totalorder %s10, 1
    %p132 = por %p130, %p131
    %p133 = scmp.ne.s32.totalorder %s125, %s128
    %p134 = scmp.eq.s32.totalorder %s10, 0
    %p135 = por %p133, %p134
    %p136 = scmp.ne.s32.totalorder %s125, %s128
    %p137 = scmp.eq.s32.totalorder %s15, 1
    %p138 = por %p136, %p137
    %p139 = scmp.ne.s32.totalorder %s128, %s129
    %p140 = scmp.eq.s32.totalorder %s15, 0
    %p141 = por %p139, %p140
    %p142 = scmp.ne.s32.totalorder %s128, %s129
    %p143 = scmp.eq.s32.totalorder %s16, 1
    %p144 = por %p142, %p143
    %p146 = scmp.ne.s32.totalorder %s129, %s145
    %p147 = scmp.eq.s32.totalorder %s16, 0
    %p148 = por %p146, %p147
    %p149 = scmp.le.s32.totalorder 1, %s10
    %p150 = scmp.lt.s32.totalorder %s10, 3
    %p151 = pnand %p149, %p150
    %p152 = pneg %p151
    // Predicated region
    $region9: #{efficient_conv3d_block_pallas.2} parent=5 // pred_check
      _
    $region10: #{efficient_conv3d_block_pallas.2} parent=5 // pred_check_branch
      %154 = sbr.rel (%p151) target = $region12
    $region11: #{efficient_conv3d_block_pallas.2} parent=5 // pred_region
      %s155 = ssub.s32 %s10, 1
      // Predicated region
      $region13: #{efficient_conv3d_block_pallas.2} parent=11 // pred_check
        %p156 = pneg %p71
      $region14: #{efficient_conv3d_block_pallas.2} parent=11 // pred_check_branch
        %158 = sbr.rel (%p156) target = $region16
      $region15: #{efficient_conv3d_block_pallas.2} parent=11 // pred_region
        _
      $region16: #{efficient_conv3d_block_pallas.2} parent=11 // pred_fallthru
        _
      // Predicated region
      $region17: #{efficient_conv3d_block_pallas.2} parent=11 // pred_check
        %p159 = pneg %p92
      $region18: #{efficient_conv3d_block_pallas.2} parent=11 // pred_check_branch
        %161 = sbr.rel (%p159) target = $region20
      $region19: #{efficient_conv3d_block_pallas.2} parent=11 // pred_region
        _
      $region20: #{efficient_conv3d_block_pallas.2} parent=11 // pred_fallthru
        _
      // Predicated region
      $region21: #{efficient_conv3d_block_pallas.2} parent=11 // pred_check
        %p162 = pneg %p113
      $region22: #{efficient_conv3d_block_pallas.2} parent=11 // pred_check_branch
        %164 = sbr.rel (%p162) target = $region24
      $region23: #{efficient_conv3d_block_pallas.2} parent=11 // pred_region
        _
      $region24: #{efficient_conv3d_block_pallas.2} parent=11 // pred_fallthru
        _
    $region12: #{efficient_conv3d_block_pallas.2} parent=5 // pred_fallthru
      _
    %p165 = scmp.lt.s32.totalorder %s10, 2
    // Predicated region
    $region25: #{efficient_conv3d_block_pallas.2} parent=5 // pred_check
      %p166 = pneg %p165
    $region26: #{efficient_conv3d_block_pallas.2} parent=5 // pred_check_branch
      %168 = sbr.rel (%p166) target = $region28
    $region27: #{efficient_conv3d_block_pallas.2} parent=5 // pred_region
      // Predicated region
      $region29: #{efficient_conv3d_block_pallas.2} parent=27 // pred_check
        %p169 = pneg %p44
      $region30: #{efficient_conv3d_block_pallas.2} parent=27 // pred_check_branch
        %171 = sbr.rel (%p169) target = $region32
      $region31: #{efficient_conv3d_block_pallas.2} parent=27 // pred_region
        %s172 = smul.u32 8, %s18
        %p173 = scmp.lt.s32.totalorder %s17, 1
        %s174 = scalar_select %p173, %s17, 1
        %p175 = scmp.lt.s32.totalorder %s172, 7
        %s176 = scalar_select %p175, %s172, 7
        %s177 = smul.addr %s176, 39
        %s178 = smul.addr %s174, 312
        %s179 = sadd.s32 %s177, %s178
        %s180 = smul.addr %s179, 4
        %s181 = scalar_lea.vmem %s0, %s180
        %s182 = smul.u32 8, %s18
      $region32: #{efficient_conv3d_block_pallas.2} parent=27 // pred_fallthru
        _
    $region28: #{efficient_conv3d_block_pallas.2} parent=5 // pred_fallthru
      _
    %p183 = scmp.le.s32.totalorder 1, %s10
    %p184 = scmp.lt.s32.totalorder %s10, 3
    %p185 = pnand %p183, %p184
    %p186 = pneg %p185
    // Predicated region
    $region33: #{efficient_conv3d_block_pallas.2} parent=5 // pred_check
      _
    $region34: #{efficient_conv3d_block_pallas.2} parent=5 // pred_check_branch
      %188 = sbr.rel (%p185) target = $region36
    $region35: #{efficient_conv3d_block_pallas.2} parent=5 // pred_region
      %s189 = ssub.s32 %s10, 1
      %s190 = smul.u32 8, %s20
      %p191 = scmp.lt.s32.totalorder %s19, 1
      %s192 = scalar_select %p191, %s19, 1
      %p193 = scmp.lt.s32.totalorder %s190, 7
      %s194 = scalar_select %p193, %s190, 7
      %s195 = smul.addr %s194, 39
      %s196 = smul.addr %s192, 312
      %s197 = sadd.s32 %s195, %s196
      %s198 = smul.addr %s197, 4
      %s199 = scalar_lea.vmem %s0, %s198
      %p200 = pneg %p50
      %p201 = pneg %p47
      %p202 = pneg %p71
      %p203 = pneg %p68
      %p204 = pneg %p92
      %p205 = pneg %p89
      %p206 = pneg %p113
      %p207 = pneg %p110
      %p208 = pneg %p141
      %p209 = pneg %p138
      %p210 = scmp.lt.s32.totalorder %s19, 1
      %s211 = scalar_select %p210, %s19, 1
      %p212 = scmp.lt.s32.totalorder %s20, 0
      %s213 = scalar_select %p212, %s20, 0
      %s214 = sadd.s32 %s213, %s211
      %s215 = smul.addr %s214, 8
      %s216 = scalar_lea.vmem %s4, %s215
      %s217 = smul.u32 8, %s20
      %p218 = scmp.lt.s32.totalorder %s19, 1
      %s219 = scalar_select %p218, %s19, 1
      %p220 = scmp.lt.s32.totalorder %s217, 7
      %s221 = scalar_select %p220, %s217, 7
      %s222 = smul.addr %s221, 39
      %s223 = smul.addr %s219, 312
      %s224 = sadd.s32 %s222, %s223
      %s225 = smul.addr %s224, 4
      %s226 = scalar_lea.vmem %s0, %s225
      %s227 = smul.u32 8, %s20
      %p228 = scmp.lt.s32.totalorder %s19, 1
      %s229 = scalar_select %p228, %s19, 1
      %p230 = scmp.lt.s32.totalorder %s20, 0
      %s231 = scalar_select %p230, %s20, 0
      %s232 = sadd.s32 %s231, %s229
      %s233 = smul.addr %s232, 8
      %s234 = scalar_lea.vmem %s4, %s233
      %v235 = vld [vmem:[%s226] sm:$0xff]
      %v236 = vld [vmem:[%s226 + $0x8] sm:$0xff]
      %v237 = vld [vmem:[%s226 + $0x10] sm:$0xff]
      %v238 = vld [vmem:[%s226 + $0x18] sm:$0xff]
      %v239 = vld [vmem:[%s226 + $0x20] sm:$0xff]
      %v240 = vld [vmem:[%s226 + $0x28] sm:$0xff]
      %v241 = vld [vmem:[%s226 + $0x30] sm:$0xff]
      %v242 = vld [vmem:[%s226 + $0x38] sm:$0xff]
      %v243 = vld [vmem:[%s226 + $0x40] sm:$0xff]
      %v244 = vld [vmem:[%s226 + $0x48] sm:$0xff]
      %v245 = vld [vmem:[%s226 + $0x50] sm:$0xff]
      %v246 = vld [vmem:[%s226 + $0x58] sm:$0xff]
      %v247 = vld [vmem:[%s226 + $0x60] sm:$0xff]
      %v248 = vld [vmem:[%s226 + $0x68] sm:$0xff]
      %v249 = vld [vmem:[%s226 + $0x70] sm:$0xff]
      %v250 = vld [vmem:[%s226 + $0x78] sm:$0xff]
      %v251 = vld [vmem:[%s226 + $0x80] sm:$0xff]
      %v252 = vld [vmem:[%s226 + $0x88] sm:$0xff]
      %v253 = vld [vmem:[%s226 + $0x90] sm:$0xff]
      %v254 = vld [vmem:[%s226 + $0x98] sm:$0xf]
      %v255 = vld [vmem:[%s226 + $0x9c] sm:$0xff]
      %v256 = vld [vmem:[%s226 + $0xa4] sm:$0xff]
      %v257 = vld [vmem:[%s226 + $0xac] sm:$0xff]
      %v258 = vld [vmem:[%s226 + $0xb4] sm:$0xff]
      %v259 = vld [vmem:[%s226 + $0xbc] sm:$0xff]
      %v260 = vld [vmem:[%s226 + $0xc4] sm:$0xff]
      %v261 = vld [vmem:[%s226 + $0xcc] sm:$0xff]
      %v262 = vld [vmem:[%s226 + $0xd4] sm:$0xff]
      %v263 = vld [vmem:[%s226 + $0xdc] sm:$0xff]
      %v264 = vld [vmem:[%s226 + $0xe4] sm:$0xff]
      %v265 = vld [vmem:[%s226 + $0xec] sm:$0xff]
      %v266 = vld [vmem:[%s226 + $0xf4] sm:$0xff]
      %v267 = vld [vmem:[%s226 + $0xfc] sm:$0xff]
      %v268 = vld [vmem:[%s226 + $0x104] sm:$0xff]
      %v269 = vld [vmem:[%s226 + $0x10c] sm:$0xff]
      %v270 = vld [vmem:[%s226 + $0x114] sm:$0xff]
      %v271 = vld [vmem:[%s226 + $0x11c] sm:$0xff]
      %v272 = vld [vmem:[%s226 + $0x124] sm:$0xff]
      %v273 = vld [vmem:[%s226 + $0x12c] sm:$0xff]
      %v274 = vld [vmem:[%s226 + $0x134] sm:$0xf]
      %v275 = vld [vmem:[%s226 + $0x138] sm:$0xff]
      %v276 = vld [vmem:[%s226 + $0x140] sm:$0xff]
      %v277 = vld [vmem:[%s226 + $0x148] sm:$0xff]
      %v278 = vld [vmem:[%s226 + $0x150] sm:$0xff]
      %v279 = vld [vmem:[%s226 + $0x158] sm:$0xff]
      %v280 = vld [vmem:[%s226 + $0x160] sm:$0xff]
      %v281 = vld [vmem:[%s226 + $0x168] sm:$0xff]
      %v282 = vld [vmem:[%s226 + $0x170] sm:$0xff]
      %v283 = vld [vmem:[%s226 + $0x178] sm:$0xff]
      %v284 = vld [vmem:[%s226 + $0x180] sm:$0xff]
      %v285 = vld [vmem:[%s226 + $0x188] sm:$0xff]
      %v286 = vld [vmem:[%s226 + $0x190] sm:$0xff]
      %v287 = vld [vmem:[%s226 + $0x198] sm:$0xff]
      %v288 = vld [vmem:[%s226 + $0x1a0] sm:$0xff]
      %v289 = vld [vmem:[%s226 + $0x1a8] sm:$0xff]
      %v290 = vld [vmem:[%s226 + $0x1b0] sm:$0xff]
      %v291 = vld [vmem:[%s226 + $0x1b8] sm:$0xff]
      %v292 = vld [vmem:[%s226 + $0x1c0] sm:$0xff]
      %v293 = vld [vmem:[%s226 + $0x1c8] sm:$0xff]
      %v294 = vld [vmem:[%s226 + $0x1d0] sm:$0xf]
      %v295 = vld [vmem:[%s226 + $0x1d4] sm:$0xff]
      %v296 = vld [vmem:[%s226 + $0x1dc] sm:$0xff]
      %v297 = vld [vmem:[%s226 + $0x1e4] sm:$0xff]
      %v298 = vld [vmem:[%s226 + $0x1ec] sm:$0xff]
      %v299 = vld [vmem:[%s226 + $0x1f4] sm:$0xff]
      %v300 = vld [vmem:[%s226 + $0x1fc] sm:$0xff]
      %v301 = vld [vmem:[%s226 + $0x204] sm:$0xff]
      %v302 = vld [vmem:[%s226 + $0x20c] sm:$0xff]
      %v303 = vld [vmem:[%s226 + $0x214] sm:$0xff]
      %v304 = vld [vmem:[%s226 + $0x21c] sm:$0xff]
      %v305 = vld [vmem:[%s226 + $0x224] sm:$0xff]
      %v306 = vld [vmem:[%s226 + $0x22c] sm:$0xff]
      %v307 = vld [vmem:[%s226 + $0x234] sm:$0xff]
      %v308 = vld [vmem:[%s226 + $0x23c] sm:$0xff]
      %v309 = vld [vmem:[%s226 + $0x244] sm:$0xff]
      %v310 = vld [vmem:[%s226 + $0x24c] sm:$0xff]
      %v311 = vld [vmem:[%s226 + $0x254] sm:$0xff]
      %v312 = vld [vmem:[%s226 + $0x25c] sm:$0xff]
      %v313 = vld [vmem:[%s226 + $0x264] sm:$0xff]
      %v314 = vld [vmem:[%s226 + $0x26c] sm:$0xf]
      %v315 = vld [vmem:[%s226 + $0x270] sm:$0xff]
      %v316 = vld [vmem:[%s226 + $0x278] sm:$0xff]
      %v317 = vld [vmem:[%s226 + $0x280] sm:$0xff]
      %v318 = vld [vmem:[%s226 + $0x288] sm:$0xff]
      %v319 = vld [vmem:[%s226 + $0x290] sm:$0xff]
      %v320 = vld [vmem:[%s226 + $0x298] sm:$0xff]
      %v321 = vld [vmem:[%s226 + $0x2a0] sm:$0xff]
      %v322 = vld [vmem:[%s226 + $0x2a8] sm:$0xff]
      %v323 = vld [vmem:[%s226 + $0x2b0] sm:$0xff]
      %v324 = vld [vmem:[%s226 + $0x2b8] sm:$0xff]
      %v325 = vld [vmem:[%s226 + $0x2c0] sm:$0xff]
      %v326 = vld [vmem:[%s226 + $0x2c8] sm:$0xff]
      %v327 = vld [vmem:[%s226 + $0x2d0] sm:$0xff]
      %v328 = vld [vmem:[%s226 + $0x2d8] sm:$0xff]
      %v329 = vld [vmem:[%s226 + $0x2e0] sm:$0xff]
      %v330 = vld [vmem:[%s226 + $0x2e8] sm:$0xff]
      %v331 = vld [vmem:[%s226 + $0x2f0] sm:$0xff]
      %v332 = vld [vmem:[%s226 + $0x2f8] sm:$0xff]
      %v333 = vld [vmem:[%s226 + $0x300] sm:$0xff]
      %v334 = vld [vmem:[%s226 + $0x308] sm:$0xf]
      %v335 = vld [vmem:[%s226 + $0x30c] sm:$0xff]
      %v336 = vld [vmem:[%s226 + $0x314] sm:$0xff]
      %v337 = vld [vmem:[%s226 + $0x31c] sm:$0xff]
      %v338 = vld [vmem:[%s226 + $0x324] sm:$0xff]
      %v339 = vld [vmem:[%s226 + $0x32c] sm:$0xff]
      %v340 = vld [vmem:[%s226 + $0x334] sm:$0xff]
      %v341 = vld [vmem:[%s226 + $0x33c] sm:$0xff]
      %v342 = vld [vmem:[%s226 + $0x344] sm:$0xff]
      %v343 = vld [vmem:[%s226 + $0x34c] sm:$0xff]
      %v344 = vld [vmem:[%s226 + $0x354] sm:$0xff]
      %v345 = vld [vmem:[%s226 + $0x35c] sm:$0xff]
      %v346 = vld [vmem:[%s226 + $0x364] sm:$0xff]
      %v347 = vld [vmem:[%s226 + $0x36c] sm:$0xff]
      %v348 = vld [vmem:[%s226 + $0x374] sm:$0xff]
      %v349 = vld [vmem:[%s226 + $0x37c] sm:$0xff]
      %v350 = vld [vmem:[%s226 + $0x384] sm:$0xff]
      %v351 = vld [vmem:[%s226 + $0x38c] sm:$0xff]
      %v352 = vld [vmem:[%s226 + $0x394] sm:$0xff]
      %v353 = vld [vmem:[%s226 + $0x39c] sm:$0xff]
      %v354 = vld [vmem:[%s226 + $0x3a4] sm:$0xf]
      %v355 = vld [vmem:[%s226 + $0x3a8] sm:$0xff]
      %v356 = vld [vmem:[%s226 + $0x3b0] sm:$0xff]
      %v357 = vld [vmem:[%s226 + $0x3b8] sm:$0xff]
      %v358 = vld [vmem:[%s226 + $0x3c0] sm:$0xff]
      %v359 = vld [vmem:[%s226 + $0x3c8] sm:$0xff]
      %v360 = vld [vmem:[%s226 + $0x3d0] sm:$0xff]
      %v361 = vld [vmem:[%s226 + $0x3d8] sm:$0xff]
      %v362 = vld [vmem:[%s226 + $0x3e0] sm:$0xff]
      %v363 = vld [vmem:[%s226 + $0x3e8] sm:$0xff]
      %v364 = vld [vmem:[%s226 + $0x3f0] sm:$0xff]
      %v365 = vld [vmem:[%s226 + $0x3f8] sm:$0xff]
      %v366 = vld [vmem:[%s226 + $0x400] sm:$0xff]
      %v367 = vld [vmem:[%s226 + $0x408] sm:$0xff]
      %v368 = vld [vmem:[%s226 + $0x410] sm:$0xff]
      %v369 = vld [vmem:[%s226 + $0x418] sm:$0xff]
      %v370 = vld [vmem:[%s226 + $0x420] sm:$0xff]
      %v371 = vld [vmem:[%s226 + $0x428] sm:$0xff]
      %v372 = vld [vmem:[%s226 + $0x430] sm:$0xff]
      %v373 = vld [vmem:[%s226 + $0x438] sm:$0xff]
      %v374 = vld [vmem:[%s226 + $0x440] sm:$0xf]
      %v375 = vld [vmem:[%s226 + $0x444] sm:$0xff]
      %v376 = vld [vmem:[%s226 + $0x44c] sm:$0xff]
      %v377 = vld [vmem:[%s226 + $0x454] sm:$0xff]
      %v378 = vld [vmem:[%s226 + $0x45c] sm:$0xff]
      %v379 = vld [vmem:[%s226 + $0x464] sm:$0xff]
      %v380 = vld [vmem:[%s226 + $0x46c] sm:$0xff]
      %v381 = vld [vmem:[%s226 + $0x474] sm:$0xff]
      %v382 = vld [vmem:[%s226 + $0x47c] sm:$0xff]
      %v383 = vld [vmem:[%s226 + $0x484] sm:$0xff]
      %v384 = vld [vmem:[%s226 + $0x48c] sm:$0xff]
      %v385 = vld [vmem:[%s226 + $0x494] sm:$0xff]
      %v386 = vld [vmem:[%s226 + $0x49c] sm:$0xff]
      %v387 = vld [vmem:[%s226 + $0x4a4] sm:$0xff]
      %v388 = vld [vmem:[%s226 + $0x4ac] sm:$0xff]
      %v389 = vld [vmem:[%s226 + $0x4b4] sm:$0xff]
      %v390 = vld [vmem:[%s226 + $0x4bc] sm:$0xff]
      %v391 = vld [vmem:[%s226 + $0x4c4] sm:$0xff]
      %v392 = vld [vmem:[%s226 + $0x4cc] sm:$0xff]
      %v393 = vld [vmem:[%s226 + $0x4d4] sm:$0xff]
      %v394 = vld [vmem:[%s226 + $0x4dc] sm:$0xf]
      %v395 = vld [vmem:[%s1] sm:$0xff]
      %v396 = vld [vmem:[%s1 + $0x8] sm:$0xff]
      %v397 = vld [vmem:[%s1 + $0x10] sm:$0xff]
      %v398 = vld [vmem:[%s1 + $0x18] sm:$0xff]
      %v399 = vld [vmem:[%s1 + $0x20] sm:$0xff]
      %v400 = vld [vmem:[%s1 + $0x28] sm:$0xff]
      %v401 = vld [vmem:[%s1 + $0x30] sm:$0xff]
      %v402 = vld [vmem:[%s1 + $0x38] sm:$0xff]
      %v403 = vld [vmem:[%s1 + $0x40] sm:$0xff]
      %v404 = vld [vmem:[%s1 + $0x48] sm:$0xff]
      %v405 = vld [vmem:[%s1 + $0x50] sm:$0xff]
      %v406 = vld [vmem:[%s1 + $0x58] sm:$0xff]
      %v407 = vld [vmem:[%s1 + $0x60] sm:$0xff]
      %v408 = vld [vmem:[%s1 + $0x68] sm:$0xff]
      %v409 = vld [vmem:[%s1 + $0x70] sm:$0xff]
      %v410 = vld [vmem:[%s1 + $0x78] sm:$0xff]
      %v411 = vld [vmem:[%s1 + $0x80] sm:$0xff]
      %v412 = vld [vmem:[%s1 + $0x88] sm:$0xff]
      %v413 = vld [vmem:[%s1 + $0x90] sm:$0xff]
      %v414 = vld [vmem:[%s1 + $0x98] sm:$0xf]
      %v415 = vmul.f32 %v235, %v395
      %v416 = vmul.f32 %v236, %v396
      %v417 = vmul.f32 %v237, %v397
      %v418 = vmul.f32 %v238, %v398
      %v419 = vmul.f32 %v239, %v399
      %v420 = vmul.f32 %v240, %v400
      %v421 = vmul.f32 %v241, %v401
      %v422 = vmul.f32 %v242, %v402
      %v423 = vmul.f32 %v243, %v403
      %v424 = vmul.f32 %v244, %v404
      %v425 = vmul.f32 %v245, %v405
      %v426 = vmul.f32 %v246, %v406
      %v427 = vmul.f32 %v247, %v407
      %v428 = vmul.f32 %v248, %v408
      %v429 = vmul.f32 %v249, %v409
      %v430 = vmul.f32 %v250, %v410
      %v431 = vmul.f32 %v251, %v411
      %v432 = vmul.f32 %v252, %v412
      %v433 = vmul.f32 %v253, %v413
      %v434 = vmul.f32 %v254, %v414
      %v435 = vmul.f32 %v255, %v395
      %v436 = vmul.f32 %v256, %v396
      %v437 = vmul.f32 %v257, %v397
      %v438 = vmul.f32 %v258, %v398
      %v439 = vmul.f32 %v259, %v399
      %v440 = vmul.f32 %v260, %v400
      %v441 = vmul.f32 %v261, %v401
      %v442 = vmul.f32 %v262, %v402
      %v443 = vmul.f32 %v263, %v403
      %v444 = vmul.f32 %v264, %v404
      %v445 = vmul.f32 %v265, %v405
      %v446 = vmul.f32 %v266, %v406
      %v447 = vmul.f32 %v267, %v407
      %v448 = vmul.f32 %v268, %v408
      %v449 = vmul.f32 %v269, %v409
      %v450 = vmul.f32 %v270, %v410
      %v451 = vmul.f32 %v271, %v411
      %v452 = vmul.f32 %v272, %v412
      %v453 = vmul.f32 %v273, %v413
      %v454 = vmul.f32 %v274, %v414
      %v455 = vmul.f32 %v275, %v395
      %v456 = vmul.f32 %v276, %v396
      %v457 = vmul.f32 %v277, %v397
      %v458 = vmul.f32 %v278, %v398
      %v459 = vmul.f32 %v279, %v399
      %v460 = vmul.f32 %v280, %v400
      %v461 = vmul.f32 %v281, %v401
      %v462 = vmul.f32 %v282, %v402
      %v463 = vmul.f32 %v283, %v403
      %v464 = vmul.f32 %v284, %v404
      %v465 = vmul.f32 %v285, %v405
      %v466 = vmul.f32 %v286, %v406
      %v467 = vmul.f32 %v287, %v407
      %v468 = vmul.f32 %v288, %v408
      %v469 = vmul.f32 %v289, %v409
      %v470 = vmul.f32 %v290, %v410
      %v471 = vmul.f32 %v291, %v411
      %v472 = vmul.f32 %v292, %v412
      %v473 = vmul.f32 %v293, %v413
      %v474 = vmul.f32 %v294, %v414
      %v475 = vmul.f32 %v295, %v395
      %v476 = vmul.f32 %v296, %v396
      %v477 = vmul.f32 %v297, %v397
      %v478 = vmul.f32 %v298, %v398
      %v479 = vmul.f32 %v299, %v399
      %v480 = vmul.f32 %v300, %v400
      %v481 = vmul.f32 %v301, %v401
      %v482 = vmul.f32 %v302, %v402
      %v483 = vmul.f32 %v303, %v403
      %v484 = vmul.f32 %v304, %v404
      %v485 = vmul.f32 %v305, %v405
      %v486 = vmul.f32 %v306, %v406
      %v487 = vmul.f32 %v307, %v407
      %v488 = vmul.f32 %v308, %v408
      %v489 = vmul.f32 %v309, %v409
      %v490 = vmul.f32 %v310, %v410
      %v491 = vmul.f32 %v311, %v411
      %v492 = vmul.f32 %v312, %v412
      %v493 = vmul.f32 %v313, %v413
      %v494 = vmul.f32 %v314, %v414
      %v495 = vmul.f32 %v315, %v395
      %v496 = vmul.f32 %v316, %v396
      %v497 = vmul.f32 %v317, %v397
      %v498 = vmul.f32 %v318, %v398
      %v499 = vmul.f32 %v319, %v399
      %v500 = vmul.f32 %v320, %v400
      %v501 = vmul.f32 %v321, %v401
      %v502 = vmul.f32 %v322, %v402
      %v503 = vmul.f32 %v323, %v403
      %v504 = vmul.f32 %v324, %v404
      %v505 = vmul.f32 %v325, %v405
      %v506 = vmul.f32 %v326, %v406
      %v507 = vmul.f32 %v327, %v407
      %v508 = vmul.f32 %v328, %v408
      %v509 = vmul.f32 %v329, %v409
      %v510 = vmul.f32 %v330, %v410
      %v511 = vmul.f32 %v331, %v411
      %v512 = vmul.f32 %v332, %v412
      %v513 = vmul.f32 %v333, %v413
      %v514 = vmul.f32 %v334, %v414
      %v515 = vmul.f32 %v335, %v395
      %v516 = vmul.f32 %v336, %v396
      %v517 = vmul.f32 %v337, %v397
      %v518 = vmul.f32 %v338, %v398
      %v519 = vmul.f32 %v339, %v399
      %v520 = vmul.f32 %v340, %v400
      %v521 = vmul.f32 %v341, %v401
      %v522 = vmul.f32 %v342, %v402
      %v523 = vmul.f32 %v343, %v403
      %v524 = vmul.f32 %v344, %v404
      %v525 = vmul.f32 %v345, %v405
      %v526 = vmul.f32 %v346, %v406
      %v527 = vmul.f32 %v347, %v407
      %v528 = vmul.f32 %v348, %v408
      %v529 = vmul.f32 %v349, %v409
      %v530 = vmul.f32 %v350, %v410
      %v531 = vmul.f32 %v351, %v411
      %v532 = vmul.f32 %v352, %v412
      %v533 = vmul.f32 %v353, %v413
      %v534 = vmul.f32 %v354, %v414
      %v535 = vmul.f32 %v355, %v395
      %v536 = vmul.f32 %v356, %v396
      %v537 = vmul.f32 %v357, %v397
      %v538 = vmul.f32 %v358, %v398
      %v539 = vmul.f32 %v359, %v399
      %v540 = vmul.f32 %v360, %v400
      %v541 = vmul.f32 %v361, %v401
      %v542 = vmul.f32 %v362, %v402
      %v543 = vmul.f32 %v363, %v403
      %v544 = vmul.f32 %v364, %v404
      %v545 = vmul.f32 %v365, %v405
      %v546 = vmul.f32 %v366, %v406
      %v547 = vmul.f32 %v367, %v407
      %v548 = vmul.f32 %v368, %v408
      %v549 = vmul.f32 %v369, %v409
      %v550 = vmul.f32 %v370, %v410
      %v551 = vmul.f32 %v371, %v411
      %v552 = vmul.f32 %v372, %v412
      %v553 = vmul.f32 %v373, %v413
      %v554 = vmul.f32 %v374, %v414
      %v555 = vmul.f32 %v375, %v395
      %v556 = vmul.f32 %v376, %v396
      %v557 = vmul.f32 %v377, %v397
      %v558 = vmul.f32 %v378, %v398
      %v559 = vmul.f32 %v379, %v399
      %v560 = vmul.f32 %v380, %v400
      %v561 = vmul.f32 %v381, %v401
      %v562 = vmul.f32 %v382, %v402
      %v563 = vmul.f32 %v383, %v403
      %v564 = vmul.f32 %v384, %v404
      %v565 = vmul.f32 %v385, %v405
      %v566 = vmul.f32 %v386, %v406
      %v567 = vmul.f32 %v387, %v407
      %v568 = vmul.f32 %v388, %v408
      %v569 = vmul.f32 %v389, %v409
      %v570 = vmul.f32 %v390, %v410
      %v571 = vmul.f32 %v391, %v411
      %v572 = vmul.f32 %v392, %v412
      %v573 = vmul.f32 %v393, %v413
      %v574 = vmul.f32 %v394, %v414
      %v727 = vcombine.high %v415, %v415
      %v728 = vcombine.high %v416, %v416
      %v729 = vcombine.high %v417, %v417
      %v730 = vcombine.high %v418, %v418
      %v731 = vcombine.high %v419, %v419
      %v732 = vcombine.high %v420, %v420
      %v733 = vcombine.high %v421, %v421
      %v734 = vcombine.high %v422, %v422
      %v735 = vcombine.high %v423, %v423
      %v736 = vcombine.high %v424, %v424
      %v737 = vcombine.high %v425, %v425
      %v738 = vcombine.high %v426, %v426
      %v739 = vcombine.high %v427, %v427
      %v740 = vcombine.high %v428, %v428
      %v741 = vcombine.high %v429, %v429
      %v742 = vcombine.high %v430, %v430
      %v743 = vcombine.high %v431, %v431
      %v744 = vcombine.high %v432, %v432
      %v745 = vcombine.high %v433, %v433
      %v746 = vcombine.high %v435, %v435
      %v747 = vcombine.high %v436, %v436
      %v748 = vcombine.high %v437, %v437
      %v749 = vcombine.high %v438, %v438
      %v750 = vcombine.high %v439, %v439
      %v751 = vcombine.high %v440, %v440
      %v752 = vcombine.high %v441, %v441
      %v753 = vcombine.high %v442, %v442
      %v754 = vcombine.high %v443, %v443
      %v755 = vcombine.high %v444, %v444
      %v756 = vcombine.high %v445, %v445
      %v757 = vcombine.high %v446, %v446
      %v758 = vcombine.high %v447, %v447
      %v759 = vcombine.high %v448, %v448
      %v760 = vcombine.high %v449, %v449
      %v761 = vcombine.high %v450, %v450
      %v762 = vcombine.high %v451, %v451
      %v763 = vcombine.high %v452, %v452
      %v764 = vcombine.high %v453, %v453
      %v765 = vcombine.high %v455, %v455
      %v766 = vcombine.high %v456, %v456
      %v767 = vcombine.high %v457, %v457
      %v768 = vcombine.high %v458, %v458
      %v769 = vcombine.high %v459, %v459
      %v770 = vcombine.high %v460, %v460
      %v771 = vcombine.high %v461, %v461
      %v772 = vcombine.high %v462, %v462
      %v773 = vcombine.high %v463, %v463
      %v774 = vcombine.high %v464, %v464
      %v775 = vcombine.high %v465, %v465
      %v776 = vcombine.high %v466, %v466
      %v777 = vcombine.high %v467, %v467
      %v778 = vcombine.high %v468, %v468
      %v779 = vcombine.high %v469, %v469
      %v780 = vcombine.high %v470, %v470
      %v781 = vcombine.high %v471, %v471
      %v782 = vcombine.high %v472, %v472
      %v783 = vcombine.high %v473, %v473
      %v784 = vcombine.high %v475, %v475
      %v785 = vcombine.high %v476, %v476
      %v786 = vcombine.high %v477, %v477
      %v787 = vcombine.high %v478, %v478
      %v788 = vcombine.high %v479, %v479
      %v789 = vcombine.high %v480, %v480
      %v790 = vcombine.high %v481, %v481
      %v791 = vcombine.high %v482, %v482
      %v792 = vcombine.high %v483, %v483
      %v793 = vcombine.high %v484, %v484
      %v794 = vcombine.high %v485, %v485
      %v795 = vcombine.high %v486, %v486
      %v796 = vcombine.high %v487, %v487
      %v797 = vcombine.high %v488, %v488
      %v798 = vcombine.high %v489, %v489
      %v799 = vcombine.high %v490, %v490
      %v800 = vcombine.high %v491, %v491
      %v801 = vcombine.high %v492, %v492
      %v802 = vcombine.high %v493, %v493
      %v803 = vcombine.high %v495, %v495
      %v804 = vcombine.high %v496, %v496
      %v805 = vcombine.high %v497, %v497
      %v806 = vcombine.high %v498, %v498
      %v807 = vcombine.high %v499, %v499
      %v808 = vcombine.high %v500, %v500
      %v809 = vcombine.high %v501, %v501
      %v810 = vcombine.high %v502, %v502
      %v811 = vcombine.high %v503, %v503
      %v812 = vcombine.high %v504, %v504
      %v813 = vcombine.high %v505, %v505
      %v814 = vcombine.high %v506, %v506
      %v815 = vcombine.high %v507, %v507
      %v816 = vcombine.high %v508, %v508
      %v817 = vcombine.high %v509, %v509
      %v818 = vcombine.high %v510, %v510
      %v819 = vcombine.high %v511, %v511
      %v820 = vcombine.high %v512, %v512
      %v821 = vcombine.high %v513, %v513
      %v822 = vcombine.high %v515, %v515
      %v823 = vcombine.high %v516, %v516
      %v824 = vcombine.high %v517, %v517
      %v825 = vcombine.high %v518, %v518
      %v826 = vcombine.high %v519, %v519
      %v827 = vcombine.high %v520, %v520
      %v828 = vcombine.high %v521, %v521
      %v829 = vcombine.high %v522, %v522
      %v830 = vcombine.high %v523, %v523
      %v831 = vcombine.high %v524, %v524
      %v832 = vcombine.high %v525, %v525
      %v833 = vcombine.high %v526, %v526
      %v834 = vcombine.high %v527, %v527
      %v835 = vcombine.high %v528, %v528
      %v836 = vcombine.high %v529, %v529
      %v837 = vcombine.high %v530, %v530
      %v838 = vcombine.high %v531, %v531
      %v839 = vcombine.high %v532, %v532
      %v840 = vcombine.high %v533, %v533
      %v841 = vcombine.high %v535, %v535
      %v842 = vcombine.high %v536, %v536
      %v843 = vcombine.high %v537, %v537
      %v844 = vcombine.high %v538, %v538
      %v845 = vcombine.high %v539, %v539
      %v846 = vcombine.high %v540, %v540
      %v847 = vcombine.high %v541, %v541
      %v848 = vcombine.high %v542, %v542
      %v849 = vcombine.high %v543, %v543
      %v850 = vcombine.high %v544, %v544
      %v851 = vcombine.high %v545, %v545
      %v852 = vcombine.high %v546, %v546
      %v853 = vcombine.high %v547, %v547
      %v854 = vcombine.high %v548, %v548
      %v855 = vcombine.high %v549, %v549
      %v856 = vcombine.high %v550, %v550
      %v857 = vcombine.high %v551, %v551
      %v858 = vcombine.high %v552, %v552
      %v859 = vcombine.high %v553, %v553
      %v860 = vcombine.high %v555, %v555
      %v861 = vcombine.high %v556, %v556
      %v862 = vcombine.high %v557, %v557
      %v863 = vcombine.high %v558, %v558
      %v864 = vcombine.high %v559, %v559
      %v865 = vcombine.high %v560, %v560
      %v866 = vcombine.high %v561, %v561
      %v867 = vcombine.high %v562, %v562
      %v868 = vcombine.high %v563, %v563
      %v869 = vcombine.high %v564, %v564
      %v870 = vcombine.high %v565, %v565
      %v871 = vcombine.high %v566, %v566
      %v872 = vcombine.high %v567, %v567
      %v873 = vcombine.high %v568, %v568
      %v874 = vcombine.high %v569, %v569
      %v875 = vcombine.high %v570, %v570
      %v876 = vcombine.high %v571, %v571
      %v877 = vcombine.high %v572, %v572
      %v878 = vcombine.high %v573, %v573
      %vm1031 = vcmask 1043456
      %v1032 = vsel %vm1031, %v415, 0.0
      %v1033 = vsel %vm1031, %v727, 0.0
      %v1034 = vadd.f32 %v1032, %v1033
      %v1035 = vsel %vm1031, %v416, 0.0
      %v1036 = vadd.f32 %v1034, %v1035
      %v1037 = vsel %vm1031, %v728, 0.0
      %v1038 = vadd.f32 %v1036, %v1037
      %v1039 = vsel %vm1031, %v417, 0.0
      %v1040 = vadd.f32 %v1038, %v1039
      %v1041 = vsel %vm1031, %v729, 0.0
      %v1042 = vadd.f32 %v1040, %v1041
      %v1043 = vsel %vm1031, %v418, 0.0
      %v1044 = vadd.f32 %v1042, %v1043
      %v1045 = vsel %vm1031, %v730, 0.0
      %v1046 = vadd.f32 %v1044, %v1045
      %v1047 = vsel %vm1031, %v419, 0.0
      %v1048 = vadd.f32 %v1046, %v1047
      %v1049 = vsel %vm1031, %v731, 0.0
      %v1050 = vadd.f32 %v1048, %v1049
      %v1051 = vsel %vm1031, %v420, 0.0
      %v1052 = vadd.f32 %v1050, %v1051
      %v1053 = vsel %vm1031, %v732, 0.0
      %v1054 = vadd.f32 %v1052, %v1053
      %v1055 = vsel %vm1031, %v421, 0.0
      %v1056 = vadd.f32 %v1054, %v1055
      %v1057 = vsel %vm1031, %v733, 0.0
      %v1058 = vadd.f32 %v1056, %v1057
      %v1059 = vsel %vm1031, %v422, 0.0
      %v1060 = vadd.f32 %v1058, %v1059
      %v1061 = vsel %vm1031, %v734, 0.0
      %v1062 = vadd.f32 %v1060, %v1061
      %v1063 = vsel %vm1031, %v423, 0.0
      %v1064 = vadd.f32 %v1062, %v1063
      %v1065 = vsel %vm1031, %v735, 0.0
      %v1066 = vadd.f32 %v1064, %v1065
      %v1067 = vsel %vm1031, %v424, 0.0
      %v1068 = vadd.f32 %v1066, %v1067
      %v1069 = vsel %vm1031, %v736, 0.0
      %v1070 = vadd.f32 %v1068, %v1069
      %v1071 = vsel %vm1031, %v425, 0.0
      %v1072 = vadd.f32 %v1070, %v1071
      %v1073 = vsel %vm1031, %v737, 0.0
      %v1074 = vadd.f32 %v1072, %v1073
      %v1075 = vsel %vm1031, %v426, 0.0
      %v1076 = vadd.f32 %v1074, %v1075
      %v1077 = vsel %vm1031, %v738, 0.0
      %v1078 = vadd.f32 %v1076, %v1077
      %v1079 = vsel %vm1031, %v427, 0.0
      %v1080 = vadd.f32 %v1078, %v1079
      %v1081 = vsel %vm1031, %v739, 0.0
      %v1082 = vadd.f32 %v1080, %v1081
      %v1083 = vsel %vm1031, %v428, 0.0
      %v1084 = vadd.f32 %v1082, %v1083
      %v1085 = vsel %vm1031, %v740, 0.0
      %v1086 = vadd.f32 %v1084, %v1085
      %v1087 = vsel %vm1031, %v429, 0.0
      %v1088 = vadd.f32 %v1086, %v1087
      %v1089 = vsel %vm1031, %v741, 0.0
      %v1090 = vadd.f32 %v1088, %v1089
      %v1091 = vsel %vm1031, %v430, 0.0
      %v1092 = vadd.f32 %v1090, %v1091
      %v1093 = vsel %vm1031, %v742, 0.0
      %v1094 = vadd.f32 %v1092, %v1093
      %v1095 = vsel %vm1031, %v431, 0.0
      %v1096 = vadd.f32 %v1094, %v1095
      %v1097 = vsel %vm1031, %v743, 0.0
      %v1098 = vadd.f32 %v1096, %v1097
      %v1099 = vsel %vm1031, %v432, 0.0
      %v1100 = vadd.f32 %v1098, %v1099
      %v1101 = vsel %vm1031, %v744, 0.0
      %v1102 = vadd.f32 %v1100, %v1101
      %v1103 = vsel %vm1031, %v433, 0.0
      %v1104 = vadd.f32 %v1102, %v1103
      %v1105 = vsel %vm1031, %v745, 0.0
      %v1106 = vadd.f32 %v1104, %v1105
      %vm1107 = vcmask 396288
      %v1108 = vsel %vm1107, %v434, 0.0
      %v1109 = vadd.f32 %v1106, %v1108
      %1110 = vadd.xlane.f32.xlu0 %v1109
      %v1111 = vpop.xlane.xlu0 %1110
      %v1112 = vsel %vm1031, %v435, 0.0
      %v1113 = vsel %vm1031, %v746, 0.0
      %v1114 = vadd.f32 %v1112, %v1113
      %v1115 = vsel %vm1031, %v436, 0.0
      %v1116 = vadd.f32 %v1114, %v1115
      %v1117 = vsel %vm1031, %v747, 0.0
      %v1118 = vadd.f32 %v1116, %v1117
      %v1119 = vsel %vm1031, %v437, 0.0
      %v1120 = vadd.f32 %v1118, %v1119
      %v1121 = vsel %vm1031, %v748, 0.0
      %v1122 = vadd.f32 %v1120, %v1121
      %v1123 = vsel %vm1031, %v438, 0.0
      %v1124 = vadd.f32 %v1122, %v1123
      %v1125 = vsel %vm1031, %v749, 0.0
      %v1126 = vadd.f32 %v1124, %v1125
      %v1127 = vsel %vm1031, %v439, 0.0
      %v1128 = vadd.f32 %v1126, %v1127
      %v1129 = vsel %vm1031, %v750, 0.0
      %v1130 = vadd.f32 %v1128, %v1129
      %v1131 = vsel %vm1031, %v440, 0.0
      %v1132 = vadd.f32 %v1130, %v1131
      %v1133 = vsel %vm1031, %v751, 0.0
      %v1134 = vadd.f32 %v1132, %v1133
      %v1135 = vsel %vm1031, %v441, 0.0
      %v1136 = vadd.f32 %v1134, %v1135
      %v1137 = vsel %vm1031, %v752, 0.0
      %v1138 = vadd.f32 %v1136, %v1137
      %v1139 = vsel %vm1031, %v442, 0.0
      %v1140 = vadd.f32 %v1138, %v1139
      %v1141 = vsel %vm1031, %v753, 0.0
      %v1142 = vadd.f32 %v1140, %v1141
      %v1143 = vsel %vm1031, %v443, 0.0
      %v1144 = vadd.f32 %v1142, %v1143
      %v1145 = vsel %vm1031, %v754, 0.0
      %v1146 = vadd.f32 %v1144, %v1145
      %v1147 = vsel %vm1031, %v444, 0.0
      %v1148 = vadd.f32 %v1146, %v1147
      %v1149 = vsel %vm1031, %v755, 0.0
      %v1150 = vadd.f32 %v1148, %v1149
      %v1151 = vsel %vm1031, %v445, 0.0
      %v1152 = vadd.f32 %v1150, %v1151
      %v1153 = vsel %vm1031, %v756, 0.0
      %v1154 = vadd.f32 %v1152, %v1153
      %v1155 = vsel %vm1031, %v446, 0.0
      %v1156 = vadd.f32 %v1154, %v1155
      %v1157 = vsel %vm1031, %v757, 0.0
      %v1158 = vadd.f32 %v1156, %v1157
      %v1159 = vsel %vm1031, %v447, 0.0
      %v1160 = vadd.f32 %v1158, %v1159
      %v1161 = vsel %vm1031, %v758, 0.0
      %v1162 = vadd.f32 %v1160, %v1161
      %v1163 = vsel %vm1031, %v448, 0.0
      %v1164 = vadd.f32 %v1162, %v1163
      %v1165 = vsel %vm1031, %v759, 0.0
      %v1166 = vadd.f32 %v1164, %v1165
      %v1167 = vsel %vm1031, %v449, 0.0
      %v1168 = vadd.f32 %v1166, %v1167
      %v1169 = vsel %vm1031, %v760, 0.0
      %v1170 = vadd.f32 %v1168, %v1169
      %v1171 = vsel %vm1031, %v450, 0.0
      %v1172 = vadd.f32 %v1170, %v1171
      %v1173 = vsel %vm1031, %v761, 0.0
      %v1174 = vadd.f32 %v1172, %v1173
      %v1175 = vsel %vm1031, %v451, 0.0
      %v1176 = vadd.f32 %v1174, %v1175
      %v1177 = vsel %vm1031, %v762, 0.0
      %v1178 = vadd.f32 %v1176, %v1177
      %v1179 = vsel %vm1031, %v452, 0.0
      %v1180 = vadd.f32 %v1178, %v1179
      %v1181 = vsel %vm1031, %v763, 0.0
      %v1182 = vadd.f32 %v1180, %v1181
      %v1183 = vsel %vm1031, %v453, 0.0
      %v1184 = vadd.f32 %v1182, %v1183
      %v1185 = vsel %vm1031, %v764, 0.0
      %v1186 = vadd.f32 %v1184, %v1185
      %v1187 = vsel %vm1107, %v454, 0.0
      %v1188 = vadd.f32 %v1186, %v1187
      %1189 = vadd.xlane.f32.xlu0 %v1188
      %v1190 = vpop.xlane.xlu0 %1189
      %v1191 = vsel %vm1031, %v455, 0.0
      %v1192 = vsel %vm1031, %v765, 0.0
      %v1193 = vadd.f32 %v1191, %v1192
      %v1194 = vsel %vm1031, %v456, 0.0
      %v1195 = vadd.f32 %v1193, %v1194
      %v1196 = vsel %vm1031, %v766, 0.0
      %v1197 = vadd.f32 %v1195, %v1196
      %v1198 = vsel %vm1031, %v457, 0.0
      %v1199 = vadd.f32 %v1197, %v1198
      %v1200 = vsel %vm1031, %v767, 0.0
      %v1201 = vadd.f32 %v1199, %v1200
      %v1202 = vsel %vm1031, %v458, 0.0
      %v1203 = vadd.f32 %v1201, %v1202
      %v1204 = vsel %vm1031, %v768, 0.0
      %v1205 = vadd.f32 %v1203, %v1204
      %v1206 = vsel %vm1031, %v459, 0.0
      %v1207 = vadd.f32 %v1205, %v1206
      %v1208 = vsel %vm1031, %v769, 0.0
      %v1209 = vadd.f32 %v1207, %v1208
      %v1210 = vsel %vm1031, %v460, 0.0
      %v1211 = vadd.f32 %v1209, %v1210
      %v1212 = vsel %vm1031, %v770, 0.0
      %v1213 = vadd.f32 %v1211, %v1212
      %v1214 = vsel %vm1031, %v461, 0.0
      %v1215 = vadd.f32 %v1213, %v1214
      %v1216 = vsel %vm1031, %v771, 0.0
      %v1217 = vadd.f32 %v1215, %v1216
      %v1218 = vsel %vm1031, %v462, 0.0
      %v1219 = vadd.f32 %v1217, %v1218
      %v1220 = vsel %vm1031, %v772, 0.0
      %v1221 = vadd.f32 %v1219, %v1220
      %v1222 = vsel %vm1031, %v463, 0.0
      %v1223 = vadd.f32 %v1221, %v1222
      %v1224 = vsel %vm1031, %v773, 0.0
      %v1225 = vadd.f32 %v1223, %v1224
      %v1226 = vsel %vm1031, %v464, 0.0
      %v1227 = vadd.f32 %v1225, %v1226
      %v1228 = vsel %vm1031, %v774, 0.0
      %v1229 = vadd.f32 %v1227, %v1228
      %v1230 = vsel %vm1031, %v465, 0.0
      %v1231 = vadd.f32 %v1229, %v1230
      %v1232 = vsel %vm1031, %v775, 0.0
      %v1233 = vadd.f32 %v1231, %v1232
      %v1234 = vsel %vm1031, %v466, 0.0
      %v1235 = vadd.f32 %v1233, %v1234
      %v1236 = vsel %vm1031, %v776, 0.0
      %v1237 = vadd.f32 %v1235, %v1236
      %v1238 = vsel %vm1031, %v467, 0.0
      %v1239 = vadd.f32 %v1237, %v1238
      %v1240 = vsel %vm1031, %v777, 0.0
      %v1241 = vadd.f32 %v1239, %v1240
      %v1242 = vsel %vm1031, %v468, 0.0
      %v1243 = vadd.f32 %v1241, %v1242
      %v1244 = vsel %vm1031, %v778, 0.0
      %v1245 = vadd.f32 %v1243, %v1244
      %v1246 = vsel %vm1031, %v469, 0.0
      %v1247 = vadd.f32 %v1245, %v1246
      %v1248 = vsel %vm1031, %v779, 0.0
      %v1249 = vadd.f32 %v1247, %v1248
      %v1250 = vsel %vm1031, %v470, 0.0
      %v1251 = vadd.f32 %v1249, %v1250
      %v1252 = vsel %vm1031, %v780, 0.0
      %v1253 = vadd.f32 %v1251, %v1252
      %v1254 = vsel %vm1031, %v471, 0.0
      %v1255 = vadd.f32 %v1253, %v1254
      %v1256 = vsel %vm1031, %v781, 0.0
      %v1257 = vadd.f32 %v1255, %v1256
      %v1258 = vsel %vm1031, %v472, 0.0
      %v1259 = vadd.f32 %v1257, %v1258
      %v1260 = vsel %vm1031, %v782, 0.0
      %v1261 = vadd.f32 %v1259, %v1260
      %v1262 = vsel %vm1031, %v473, 0.0
      %v1263 = vadd.f32 %v1261, %v1262
      %v1264 = vsel %vm1031, %v783, 0.0
      %v1265 = vadd.f32 %v1263, %v1264
      %v1266 = vsel %vm1107, %v474, 0.0
      %v1267 = vadd.f32 %v1265, %v1266
      %1268 = vadd.xlane.f32.xlu0 %v1267
      %v1269 = vpop.xlane.xlu0 %1268
      %v1270 = vsel %vm1031, %v475, 0.0
      %v1271 = vsel %vm1031, %v784, 0.0
      %v1272 = vadd.f32 %v1270, %v1271
      %v1273 = vsel %vm1031, %v476, 0.0
      %v1274 = vadd.f32 %v1272, %v1273
      %v1275 = vsel %vm1031, %v785, 0.0
      %v1276 = vadd.f32 %v1274, %v1275
      %v1277 = vsel %vm1031, %v477, 0.0
      %v1278 = vadd.f32 %v1276, %v1277
      %v1279 = vsel %vm1031, %v786, 0.0
      %v1280 = vadd.f32 %v1278, %v1279
      %v1281 = vsel %vm1031, %v478, 0.0
      %v1282 = vadd.f32 %v1280, %v1281
      %v1283 = vsel %vm1031, %v787, 0.0
      %v1284 = vadd.f32 %v1282, %v1283
      %v1285 = vsel %vm1031, %v479, 0.0
      %v1286 = vadd.f32 %v1284, %v1285
      %v1287 = vsel %vm1031, %v788, 0.0
      %v1288 = vadd.f32 %v1286, %v1287
      %v1289 = vsel %vm1031, %v480, 0.0
      %v1290 = vadd.f32 %v1288, %v1289
      %v1291 = vsel %vm1031, %v789, 0.0
      %v1292 = vadd.f32 %v1290, %v1291
      %v1293 = vsel %vm1031, %v481, 0.0
      %v1294 = vadd.f32 %v1292, %v1293
      %v1295 = vsel %vm1031, %v790, 0.0
      %v1296 = vadd.f32 %v1294, %v1295
      %v1297 = vsel %vm1031, %v482, 0.0
      %v1298 = vadd.f32 %v1296, %v1297
      %v1299 = vsel %vm1031, %v791, 0.0
      %v1300 = vadd.f32 %v1298, %v1299
      %v1301 = vsel %vm1031, %v483, 0.0
      %v1302 = vadd.f32 %v1300, %v1301
      %v1303 = vsel %vm1031, %v792, 0.0
      %v1304 = vadd.f32 %v1302, %v1303
      %v1305 = vsel %vm1031, %v484, 0.0
      %v1306 = vadd.f32 %v1304, %v1305
      %v1307 = vsel %vm1031, %v793, 0.0
      %v1308 = vadd.f32 %v1306, %v1307
      %v1309 = vsel %vm1031, %v485, 0.0
      %v1310 = vadd.f32 %v1308, %v1309
      %v1311 = vsel %vm1031, %v794, 0.0
      %v1312 = vadd.f32 %v1310, %v1311
      %v1313 = vsel %vm1031, %v486, 0.0
      %v1314 = vadd.f32 %v1312, %v1313
      %v1315 = vsel %vm1031, %v795, 0.0
      %v1316 = vadd.f32 %v1314, %v1315
      %v1317 = vsel %vm1031, %v487, 0.0
      %v1318 = vadd.f32 %v1316, %v1317
      %v1319 = vsel %vm1031, %v796, 0.0
      %v1320 = vadd.f32 %v1318, %v1319
      %v1321 = vsel %vm1031, %v488, 0.0
      %v1322 = vadd.f32 %v1320, %v1321
      %v1323 = vsel %vm1031, %v797, 0.0
      %v1324 = vadd.f32 %v1322, %v1323
      %v1325 = vsel %vm1031, %v489, 0.0
      %v1326 = vadd.f32 %v1324, %v1325
      %v1327 = vsel %vm1031, %v798, 0.0
      %v1328 = vadd.f32 %v1326, %v1327
      %v1329 = vsel %vm1031, %v490, 0.0
      %v1330 = vadd.f32 %v1328, %v1329
      %v1331 = vsel %vm1031, %v799, 0.0
      %v1332 = vadd.f32 %v1330, %v1331
      %v1333 = vsel %vm1031, %v491, 0.0
      %v1334 = vadd.f32 %v1332, %v1333
      %v1335 = vsel %vm1031, %v800, 0.0
      %v1336 = vadd.f32 %v1334, %v1335
      %v1337 = vsel %vm1031, %v492, 0.0
      %v1338 = vadd.f32 %v1336, %v1337
      %v1339 = vsel %vm1031, %v801, 0.0
      %v1340 = vadd.f32 %v1338, %v1339
      %v1341 = vsel %vm1031, %v493, 0.0
      %v1342 = vadd.f32 %v1340, %v1341
      %v1343 = vsel %vm1031, %v802, 0.0
      %v1344 = vadd.f32 %v1342, %v1343
      %v1345 = vsel %vm1107, %v494, 0.0
      %v1346 = vadd.f32 %v1344, %v1345
      %1347 = vadd.xlane.f32.xlu0 %v1346
      %v1348 = vpop.xlane.xlu0 %1347
      %v1349 = vsel %vm1031, %v495, 0.0
      %v1350 = vsel %vm1031, %v803, 0.0
      %v1351 = vadd.f32 %v1349, %v1350
      %v1352 = vsel %vm1031, %v496, 0.0
      %v1353 = vadd.f32 %v1351, %v1352
      %v1354 = vsel %vm1031, %v804, 0.0
      %v1355 = vadd.f32 %v1353, %v1354
      %v1356 = vsel %vm1031, %v497, 0.0
      %v1357 = vadd.f32 %v1355, %v1356
      %v1358 = vsel %vm1031, %v805, 0.0
      %v1359 = vadd.f32 %v1357, %v1358
      %v1360 = vsel %vm1031, %v498, 0.0
      %v1361 = vadd.f32 %v1359, %v1360
      %v1362 = vsel %vm1031, %v806, 0.0
      %v1363 = vadd.f32 %v1361, %v1362
      %v1364 = vsel %vm1031, %v499, 0.0
      %v1365 = vadd.f32 %v1363, %v1364
      %v1366 = vsel %vm1031, %v807, 0.0
      %v1367 = vadd.f32 %v1365, %v1366
      %v1368 = vsel %vm1031, %v500, 0.0
      %v1369 = vadd.f32 %v1367, %v1368
      %v1370 = vsel %vm1031, %v808, 0.0
      %v1371 = vadd.f32 %v1369, %v1370
      %v1372 = vsel %vm1031, %v501, 0.0
      %v1373 = vadd.f32 %v1371, %v1372
      %v1374 = vsel %vm1031, %v809, 0.0
      %v1375 = vadd.f32 %v1373, %v1374
      %v1376 = vsel %vm1031, %v502, 0.0
      %v1377 = vadd.f32 %v1375, %v1376
      %v1378 = vsel %vm1031, %v810, 0.0
      %v1379 = vadd.f32 %v1377, %v1378
      %v1380 = vsel %vm1031, %v503, 0.0
      %v1381 = vadd.f32 %v1379, %v1380
      %v1382 = vsel %vm1031, %v811, 0.0
      %v1383 = vadd.f32 %v1381, %v1382
      %v1384 = vsel %vm1031, %v504, 0.0
      %v1385 = vadd.f32 %v1383, %v1384
      %v1386 = vsel %vm1031, %v812, 0.0
      %v1387 = vadd.f32 %v1385, %v1386
      %v1388 = vsel %vm1031, %v505, 0.0
      %v1389 = vadd.f32 %v1387, %v1388
      %v1390 = vsel %vm1031, %v813, 0.0
      %v1391 = vadd.f32 %v1389, %v1390
      %v1392 = vsel %vm1031, %v506, 0.0
      %v1393 = vadd.f32 %v1391, %v1392
      %v1394 = vsel %vm1031, %v814, 0.0
      %v1395 = vadd.f32 %v1393, %v1394
      %v1396 = vsel %vm1031, %v507, 0.0
      %v1397 = vadd.f32 %v1395, %v1396
      %v1398 = vsel %vm1031, %v815, 0.0
      %v1399 = vadd.f32 %v1397, %v1398
      %v1400 = vsel %vm1031, %v508, 0.0
      %v1401 = vadd.f32 %v1399, %v1400
      %v1402 = vsel %vm1031, %v816, 0.0
      %v1403 = vadd.f32 %v1401, %v1402
      %v1404 = vsel %vm1031, %v509, 0.0
      %v1405 = vadd.f32 %v1403, %v1404
      %v1406 = vsel %vm1031, %v817, 0.0
      %v1407 = vadd.f32 %v1405, %v1406
      %v1408 = vsel %vm1031, %v510, 0.0
      %v1409 = vadd.f32 %v1407, %v1408
      %v1410 = vsel %vm1031, %v818, 0.0
      %v1411 = vadd.f32 %v1409, %v1410
      %v1412 = vsel %vm1031, %v511, 0.0
      %v1413 = vadd.f32 %v1411, %v1412
      %v1414 = vsel %vm1031, %v819, 0.0
      %v1415 = vadd.f32 %v1413, %v1414
      %v1416 = vsel %vm1031, %v512, 0.0
      %v1417 = vadd.f32 %v1415, %v1416
      %v1418 = vsel %vm1031, %v820, 0.0
      %v1419 = vadd.f32 %v1417, %v1418
      %v1420 = vsel %vm1031, %v513, 0.0
      %v1421 = vadd.f32 %v1419, %v1420
      %v1422 = vsel %vm1031, %v821, 0.0
      %v1423 = vadd.f32 %v1421, %v1422
      %v1424 = vsel %vm1107, %v514, 0.0
      %v1425 = vadd.f32 %v1423, %v1424
      %1426 = vadd.xlane.f32.xlu0 %v1425
      %v1427 = vpop.xlane.xlu0 %1426
      %v1428 = vsel %vm1031, %v515, 0.0
      %v1429 = vsel %vm1031, %v822, 0.0
      %v1430 = vadd.f32 %v1428, %v1429
      %v1431 = vsel %vm1031, %v516, 0.0
      %v1432 = vadd.f32 %v1430, %v1431
      %v1433 = vsel %vm1031, %v823, 0.0
      %v1434 = vadd.f32 %v1432, %v1433
      %v1435 = vsel %vm1031, %v517, 0.0
      %v1436 = vadd.f32 %v1434, %v1435
      %v1437 = vsel %vm1031, %v824, 0.0
      %v1438 = vadd.f32 %v1436, %v1437
      %v1439 = vsel %vm1031, %v518, 0.0
      %v1440 = vadd.f32 %v1438, %v1439
      %v1441 = vsel %vm1031, %v825, 0.0
      %v1442 = vadd.f32 %v1440, %v1441
      %v1443 = vsel %vm1031, %v519, 0.0
      %v1444 = vadd.f32 %v1442, %v1443
      %v1445 = vsel %vm1031, %v826, 0.0
      %v1446 = vadd.f32 %v1444, %v1445
      %v1447 = vsel %vm1031, %v520, 0.0
      %v1448 = vadd.f32 %v1446, %v1447
      %v1449 = vsel %vm1031, %v827, 0.0
      %v1450 = vadd.f32 %v1448, %v1449
      %v1451 = vsel %vm1031, %v521, 0.0
      %v1452 = vadd.f32 %v1450, %v1451
      %v1453 = vsel %vm1031, %v828, 0.0
      %v1454 = vadd.f32 %v1452, %v1453
      %v1455 = vsel %vm1031, %v522, 0.0
      %v1456 = vadd.f32 %v1454, %v1455
      %v1457 = vsel %vm1031, %v829, 0.0
      %v1458 = vadd.f32 %v1456, %v1457
      %v1459 = vsel %vm1031, %v523, 0.0
      %v1460 = vadd.f32 %v1458, %v1459
      %v1461 = vsel %vm1031, %v830, 0.0
      %v1462 = vadd.f32 %v1460, %v1461
      %v1463 = vsel %vm1031, %v524, 0.0
      %v1464 = vadd.f32 %v1462, %v1463
      %v1465 = vsel %vm1031, %v831, 0.0
      %v1466 = vadd.f32 %v1464, %v1465
      %v1467 = vsel %vm1031, %v525, 0.0
      %v1468 = vadd.f32 %v1466, %v1467
      %v1469 = vsel %vm1031, %v832, 0.0
      %v1470 = vadd.f32 %v1468, %v1469
      %v1471 = vsel %vm1031, %v526, 0.0
      %v1472 = vadd.f32 %v1470, %v1471
      %v1473 = vsel %vm1031, %v833, 0.0
      %v1474 = vadd.f32 %v1472, %v1473
      %v1475 = vsel %vm1031, %v527, 0.0
      %v1476 = vadd.f32 %v1474, %v1475
      %v1477 = vsel %vm1031, %v834, 0.0
      %v1478 = vadd.f32 %v1476, %v1477
      %v1479 = vsel %vm1031, %v528, 0.0
      %v1480 = vadd.f32 %v1478, %v1479
      %v1481 = vsel %vm1031, %v835, 0.0
      %v1482 = vadd.f32 %v1480, %v1481
      %v1483 = vsel %vm1031, %v529, 0.0
      %v1484 = vadd.f32 %v1482, %v1483
      %v1485 = vsel %vm1031, %v836, 0.0
      %v1486 = vadd.f32 %v1484, %v1485
      %v1487 = vsel %vm1031, %v530, 0.0
      %v1488 = vadd.f32 %v1486, %v1487
      %v1489 = vsel %vm1031, %v837, 0.0
      %v1490 = vadd.f32 %v1488, %v1489
      %v1491 = vsel %vm1031, %v531, 0.0
      %v1492 = vadd.f32 %v1490, %v1491
      %v1493 = vsel %vm1031, %v838, 0.0
      %v1494 = vadd.f32 %v1492, %v1493
      %v1495 = vsel %vm1031, %v532, 0.0
      %v1496 = vadd.f32 %v1494, %v1495
      %v1497 = vsel %vm1031, %v839, 0.0
      %v1498 = vadd.f32 %v1496, %v1497
      %v1499 = vsel %vm1031, %v533, 0.0
      %v1500 = vadd.f32 %v1498, %v1499
      %v1501 = vsel %vm1031, %v840, 0.0
      %v1502 = vadd.f32 %v1500, %v1501
      %v1503 = vsel %vm1107, %v534, 0.0
      %v1504 = vadd.f32 %v1502, %v1503
      %1505 = vadd.xlane.f32.xlu0 %v1504
      %v1506 = vpop.xlane.xlu0 %1505
      %v1507 = vsel %vm1031, %v535, 0.0
      %v1508 = vsel %vm1031, %v841, 0.0
      %v1509 = vadd.f32 %v1507, %v1508
      %v1510 = vsel %vm1031, %v536, 0.0
      %v1511 = vadd.f32 %v1509, %v1510
      %v1512 = vsel %vm1031, %v842, 0.0
      %v1513 = vadd.f32 %v1511, %v1512
      %v1514 = vsel %vm1031, %v537, 0.0
      %v1515 = vadd.f32 %v1513, %v1514
      %v1516 = vsel %vm1031, %v843, 0.0
      %v1517 = vadd.f32 %v1515, %v1516
      %v1518 = vsel %vm1031, %v538, 0.0
      %v1519 = vadd.f32 %v1517, %v1518
      %v1520 = vsel %vm1031, %v844, 0.0
      %v1521 = vadd.f32 %v1519, %v1520
      %v1522 = vsel %vm1031, %v539, 0.0
      %v1523 = vadd.f32 %v1521, %v1522
      %v1524 = vsel %vm1031, %v845, 0.0
      %v1525 = vadd.f32 %v1523, %v1524
      %v1526 = vsel %vm1031, %v540, 0.0
      %v1527 = vadd.f32 %v1525, %v1526
      %v1528 = vsel %vm1031, %v846, 0.0
      %v1529 = vadd.f32 %v1527, %v1528
      %v1530 = vsel %vm1031, %v541, 0.0
      %v1531 = vadd.f32 %v1529, %v1530
      %v1532 = vsel %vm1031, %v847, 0.0
      %v1533 = vadd.f32 %v1531, %v1532
      %v1534 = vsel %vm1031, %v542, 0.0
      %v1535 = vadd.f32 %v1533, %v1534
      %v1536 = vsel %vm1031, %v848, 0.0
      %v1537 = vadd.f32 %v1535, %v1536
      %v1538 = vsel %vm1031, %v543, 0.0
      %v1539 = vadd.f32 %v1537, %v1538
      %v1540 = vsel %vm1031, %v849, 0.0
      %v1541 = vadd.f32 %v1539, %v1540
      %v1542 = vsel %vm1031, %v544, 0.0
      %v1543 = vadd.f32 %v1541, %v1542
      %v1544 = vsel %vm1031, %v850, 0.0
      %v1545 = vadd.f32 %v1543, %v1544
      %v1546 = vsel %vm1031, %v545, 0.0
      %v1547 = vadd.f32 %v1545, %v1546
      %v1548 = vsel %vm1031, %v851, 0.0
      %v1549 = vadd.f32 %v1547, %v1548
      %v1550 = vsel %vm1031, %v546, 0.0
      %v1551 = vadd.f32 %v1549, %v1550
      %v1552 = vsel %vm1031, %v852, 0.0
      %v1553 = vadd.f32 %v1551, %v1552
      %v1554 = vsel %vm1031, %v547, 0.0
      %v1555 = vadd.f32 %v1553, %v1554
      %v1556 = vsel %vm1031, %v853, 0.0
      %v1557 = vadd.f32 %v1555, %v1556
      %v1558 = vsel %vm1031, %v548, 0.0
      %v1559 = vadd.f32 %v1557, %v1558
      %v1560 = vsel %vm1031, %v854, 0.0
      %v1561 = vadd.f32 %v1559, %v1560
      %v1562 = vsel %vm1031, %v549, 0.0
      %v1563 = vadd.f32 %v1561, %v1562
      %v1564 = vsel %vm1031, %v855, 0.0
      %v1565 = vadd.f32 %v1563, %v1564
      %v1566 = vsel %vm1031, %v550, 0.0
      %v1567 = vadd.f32 %v1565, %v1566
      %v1568 = vsel %vm1031, %v856, 0.0
      %v1569 = vadd.f32 %v1567, %v1568
      %v1570 = vsel %vm1031, %v551, 0.0
      %v1571 = vadd.f32 %v1569, %v1570
      %v1572 = vsel %vm1031, %v857, 0.0
      %v1573 = vadd.f32 %v1571, %v1572
      %v1574 = vsel %vm1031, %v552, 0.0
      %v1575 = vadd.f32 %v1573, %v1574
      %v1576 = vsel %vm1031, %v858, 0.0
      %v1577 = vadd.f32 %v1575, %v1576
      %v1578 = vsel %vm1031, %v553, 0.0
      %v1579 = vadd.f32 %v1577, %v1578
      %v1580 = vsel %vm1031, %v859, 0.0
      %v1581 = vadd.f32 %v1579, %v1580
      %v1582 = vsel %vm1107, %v554, 0.0
      %v1583 = vadd.f32 %v1581, %v1582
      %1584 = vadd.xlane.f32.xlu0 %v1583
      %v1585 = vpop.xlane.xlu0 %1584
      %v1586 = vsel %vm1031, %v555, 0.0
      %v1587 = vsel %vm1031, %v860, 0.0
      %v1588 = vadd.f32 %v1586, %v1587
      %v1589 = vsel %vm1031, %v556, 0.0
      %v1590 = vadd.f32 %v1588, %v1589
      %v1591 = vsel %vm1031, %v861, 0.0
      %v1592 = vadd.f32 %v1590, %v1591
      %v1593 = vsel %vm1031, %v557, 0.0
      %v1594 = vadd.f32 %v1592, %v1593
      %v1595 = vsel %vm1031, %v862, 0.0
      %v1596 = vadd.f32 %v1594, %v1595
      %v1597 = vsel %vm1031, %v558, 0.0
      %v1598 = vadd.f32 %v1596, %v1597
      %v1599 = vsel %vm1031, %v863, 0.0
      %v1600 = vadd.f32 %v1598, %v1599
      %v1601 = vsel %vm1031, %v559, 0.0
      %v1602 = vadd.f32 %v1600, %v1601
      %v1603 = vsel %vm1031, %v864, 0.0
      %v1604 = vadd.f32 %v1602, %v1603
      %v1605 = vsel %vm1031, %v560, 0.0
      %v1606 = vadd.f32 %v1604, %v1605
      %v1607 = vsel %vm1031, %v865, 0.0
      %v1608 = vadd.f32 %v1606, %v1607
      %v1609 = vsel %vm1031, %v561, 0.0
      %v1610 = vadd.f32 %v1608, %v1609
      %v1611 = vsel %vm1031, %v866, 0.0
      %v1612 = vadd.f32 %v1610, %v1611
      %v1613 = vsel %vm1031, %v562, 0.0
      %v1614 = vadd.f32 %v1612, %v1613
      %v1615 = vsel %vm1031, %v867, 0.0
      %v1616 = vadd.f32 %v1614, %v1615
      %v1617 = vsel %vm1031, %v563, 0.0
      %v1618 = vadd.f32 %v1616, %v1617
      %v1619 = vsel %vm1031, %v868, 0.0
      %v1620 = vadd.f32 %v1618, %v1619
      %v1621 = vsel %vm1031, %v564, 0.0
      %v1622 = vadd.f32 %v1620, %v1621
      %v1623 = vsel %vm1031, %v869, 0.0
      %v1624 = vadd.f32 %v1622, %v1623
      %v1625 = vsel %vm1031, %v565, 0.0
      %v1626 = vadd.f32 %v1624, %v1625
      %v1627 = vsel %vm1031, %v870, 0.0
      %v1628 = vadd.f32 %v1626, %v1627
      %v1629 = vsel %vm1031, %v566, 0.0
      %v1630 = vadd.f32 %v1628, %v1629
      %v1631 = vsel %vm1031, %v871, 0.0
      %v1632 = vadd.f32 %v1630, %v1631
      %v1633 = vsel %vm1031, %v567, 0.0
      %v1634 = vadd.f32 %v1632, %v1633
      %v1635 = vsel %vm1031, %v872, 0.0
      %v1636 = vadd.f32 %v1634, %v1635
      %v1637 = vsel %vm1031, %v568, 0.0
      %v1638 = vadd.f32 %v1636, %v1637
      %v1639 = vsel %vm1031, %v873, 0.0
      %v1640 = vadd.f32 %v1638, %v1639
      %v1641 = vsel %vm1031, %v569, 0.0
      %v1642 = vadd.f32 %v1640, %v1641
      %v1643 = vsel %vm1031, %v874, 0.0
      %v1644 = vadd.f32 %v1642, %v1643
      %v1645 = vsel %vm1031, %v570, 0.0
      %v1646 = vadd.f32 %v1644, %v1645
      %v1647 = vsel %vm1031, %v875, 0.0
      %v1648 = vadd.f32 %v1646, %v1647
      %v1649 = vsel %vm1031, %v571, 0.0
      %v1650 = vadd.f32 %v1648, %v1649
      %v1651 = vsel %vm1031, %v876, 0.0
      %v1652 = vadd.f32 %v1650, %v1651
      %v1653 = vsel %vm1031, %v572, 0.0
      %v1654 = vadd.f32 %v1652, %v1653
      %v1655 = vsel %vm1031, %v877, 0.0
      %v1656 = vadd.f32 %v1654, %v1655
      %v1657 = vsel %vm1031, %v573, 0.0
      %v1658 = vadd.f32 %v1656, %v1657
      %v1659 = vsel %vm1031, %v878, 0.0
      %v1660 = vadd.f32 %v1658, %v1659
      %v1661 = vsel %vm1107, %v574, 0.0
      %v1662 = vadd.f32 %v1660, %v1661
      %1663 = vadd.xlane.f32.xlu0 %v1662
      %v1664 = vpop.xlane.xlu0 %1663
      %v1665 = vmul.f32 %v1111, 0.001953125
      %v1666 = vmul.f32 %v1190, 0.001953125
      %v1667 = vmul.f32 %v1269, 0.001953125
      %v1668 = vmul.f32 %v1348, 0.001953125
      %v1669 = vmul.f32 %v1427, 0.001953125
      %v1670 = vmul.f32 %v1506, 0.001953125
      %v1671 = vmul.f32 %v1585, 0.001953125
      %v1672 = vmul.f32 %v1664, 0.001953125
      %v1673 = vld [vmem:[%s2] sm:$0x1]
      %v1675 = vlaneseq
      %v1676 = vshrl.u32 %v1675, 7
      %v1677 = vsub.s32 0, %v1676
      %v1678 = vrot.slane %v1673, %v1677
      %1680 = vbcast.lane.b32.xlu0 %v1678, 256
      %v1681 = vpop.permute.xlu0 %1680
      %v1683 = vadd.f32 %v1665, %v1681
      %v1684 = vadd.f32 %v1666, %v1681
      %v1685 = vadd.f32 %v1667, %v1681
      %v1686 = vadd.f32 %v1668, %v1681
      %v1687 = vadd.f32 %v1669, %v1681
      %v1688 = vadd.f32 %v1670, %v1681
      %v1689 = vadd.f32 %v1671, %v1681
      %v1690 = vadd.f32 %v1672, %v1681
      %v1691 = vld [vmem:[%s3] sm:$0xf]
      %1700 = vset.pattern.permute.xlu0 0
      %1701 = vperm.xlu0 %1700, %v1683
      %v1702 = vpop.permute.xlu0 %1701
      %1703 = vset.pattern.permute.xlu0 0
      %1704 = vperm.xlu0 %1703, %v1684
      %v1705 = vpop.permute.xlu0 %1704
      %1706 = vset.pattern.permute.xlu0 0
      %1707 = vperm.xlu0 %1706, %v1685
      %v1708 = vpop.permute.xlu0 %1707
      %1709 = vset.pattern.permute.xlu0 0
      %1710 = vperm.xlu0 %1709, %v1686
      %v1711 = vpop.permute.xlu0 %1710
      %1712 = vset.pattern.permute.xlu0 0
      %1713 = vperm.xlu0 %1712, %v1687
      %v1714 = vpop.permute.xlu0 %1713
      %1715 = vset.pattern.permute.xlu0 0
      %1716 = vperm.xlu0 %1715, %v1688
      %v1717 = vpop.permute.xlu0 %1716
      %1718 = vset.pattern.permute.xlu0 0
      %1719 = vperm.xlu0 %1718, %v1689
      %v1720 = vpop.permute.xlu0 %1719
      %1721 = vset.pattern.permute.xlu0 0
      %1722 = vperm.xlu0 %1721, %v1690
      %v1723 = vpop.permute.xlu0 %1722
      %v1724 = vlaneseq
      %v1725 = vand.u32 %v1724, 127
      %v1726 = vlaneseq
      %v1727 = vshrl.u32 %v1726, 7
      %v1728 = vsub.s32 %v1725, %v1727
      %v1729 = vrot.slane %v1702, %v1728
      %v1730 = vlaneseq
      %v1731 = vshrl.u32 %v1730, 7
      %v1732 = vsub.s32 %v1725, %v1731
      %v1733 = vrot.slane %v1705, %v1732
      %v1734 = vlaneseq
      %v1735 = vshrl.u32 %v1734, 7
      %v1736 = vsub.s32 %v1725, %v1735
      %v1737 = vrot.slane %v1708, %v1736
      %v1738 = vlaneseq
      %v1739 = vshrl.u32 %v1738, 7
      %v1740 = vsub.s32 %v1725, %v1739
      %v1741 = vrot.slane %v1711, %v1740
      %v1742 = vlaneseq
      %v1743 = vshrl.u32 %v1742, 7
      %v1744 = vsub.s32 %v1725, %v1743
      %v1745 = vrot.slane %v1714, %v1744
      %v1746 = vlaneseq
      %v1747 = vshrl.u32 %v1746, 7
      %v1748 = vsub.s32 %v1725, %v1747
      %v1749 = vrot.slane %v1717, %v1748
      %v1750 = vlaneseq
      %v1751 = vshrl.u32 %v1750, 7
      %v1752 = vsub.s32 %v1725, %v1751
      %v1753 = vrot.slane %v1720, %v1752
      %v1754 = vlaneseq
      %v1755 = vshrl.u32 %v1754, 7
      %v1756 = vsub.s32 %v1725, %v1755
      %v1757 = vrot.slane %v1723, %v1756
      %vm1758 = vcmask 1041409
      %v1759 = vsel %vm1758, %v1733, %v1729
      %vm1760 = vcmask 1042434
      %v1761 = vsel %vm1760, %v1737, %v1759
      %vm1762 = vcmask 1043459
      %v1763 = vsel %vm1762, %v1741, %v1761
      %vm1764 = vcmask 1044484
      %v1765 = vsel %vm1764, %v1745, %v1763
      %vm1766 = vcmask 1045509
      %v1767 = vsel %vm1766, %v1749, %v1765
      %vm1768 = vcmask 1046534
      %v1769 = vsel %vm1768, %v1753, %v1767
      %vm1770 = vcmask 1047559
      %v1771 = vsel %vm1770, %v1757, %v1769
      %vm1772 = vcmask 31744
      %v1773 = vsel %vm1772, %v1771, 0
      %v1776 = vsel %vm1031, %v1691, 0
      %1778 = vmatprep.subr.mxu0 0.0
      %1779 = vmatpush1.msra.mxu0 0.0
      %1780 = vmatprep.subr.mxu0 0.0
      %1781 = vmatpush1.msra.mxu0 0.0
      %1782 = vmatprep.subr.mxu0 0.0
      %1783 = vmatpush1.msra.mxu0 0.0
      %1784 = vmatprep.subr.mxu0 0.0
      %1785 = vmatpush1.msra.mxu0 0.0
      %1786 = vmatprep.subr.mxu0 0.0
      %1787 = vmatpush1.msra.mxu0 0.0
      %1788 = vmatprep.subr.mxu0 0.0
      %1789 = vmatpush1.msra.mxu0 0.0
      %1790 = vmatprep.subr.mxu0 0.0
      %1791 = vmatpush1.msra.mxu0 0.0
      %1792 = vmatprep.subr.mxu0 0.0
      %1793 = vmatpush1.msra.mxu0 0.0
      %1794 = vmatprep.subr.mxu0 0.0
      %1795 = vmatpush1.msra.mxu0 0.0
      %1796 = vmatprep.subr.mxu0 0.0
      %1797 = vmatpush1.msra.mxu0 0.0
      %1798 = vmatprep.subr.mxu0 0.0
      %1799 = vmatpush1.msra.mxu0 0.0
      %1800 = vmatprep.subr.mxu0 0.0
      %1801 = vmatpush1.msra.mxu0 0.0
      %1802 = vmatprep.subr.mxu0 0.0
      %1803 = vmatpush1.msra.mxu0 0.0
      %1804 = vmatprep.subr.mxu0 0.0
      %1805 = vmatpush1.msra.mxu0 0.0
      %1806 = vmatprep.subr.mxu0 0.0
      %1807 = vmatpush1.msra.mxu0 0.0
      %1808 = vmatprep.subr.mxu0 0.0
      %v1809 = vand.u32 %v1776, 4294901760
      %1810 = vmatpush1.msra.mxu0 %v1809
      %1811 = vmatprep.subr.mxu0 0.0
      %1812 = vmatpush2.msra.mxu0 0.0
      %1813 = vmatprep.subr.mxu0 0.0
      %1814 = vmatpush2.msra.mxu0 0.0
      %1815 = vmatprep.subr.mxu0 0.0
      %1816 = vmatpush2.msra.mxu0 0.0
      %1817 = vmatprep.subr.mxu0 0.0
      %1818 = vmatpush2.msra.mxu0 0.0
      %1819 = vmatprep.subr.mxu0 0.0
      %1820 = vmatpush2.msra.mxu0 0.0
      %1821 = vmatprep.subr.mxu0 0.0
      %1822 = vmatpush2.msra.mxu0 0.0
      %1823 = vmatprep.subr.mxu0 0.0
      %1824 = vmatpush2.msra.mxu0 0.0
      %1825 = vmatprep.subr.mxu0 0.0
      %1826 = vmatpush2.msra.mxu0 0.0
      %1827 = vmatprep.subr.mxu0 0.0
      %1828 = vmatpush2.msra.mxu0 0.0
      %1829 = vmatprep.subr.mxu0 0.0
      %1830 = vmatpush2.msra.mxu0 0.0
      %1831 = vmatprep.subr.mxu0 0.0
      %1832 = vmatpush2.msra.mxu0 0.0
      %1833 = vmatprep.subr.mxu0 0.0
      %1834 = vmatpush2.msra.mxu0 0.0
      %1835 = vmatprep.subr.mxu0 0.0
      %1836 = vmatpush2.msra.mxu0 0.0
      %1837 = vmatprep.subr.mxu0 0.0
      %1838 = vmatpush2.msra.mxu0 0.0
      %1839 = vmatprep.subr.mxu0 0.0
      %1840 = vmatpush2.msra.mxu0 0.0
      %1841 = vmatprep.subr.mxu0 0.0
      %1842 = vmatpush2.msra.mxu0 0.0
      %1843 = vmatprep.mubr.f32.mxu0 0.0
      %v1844 = vand.u32 %v1773, 4294901760
      %v1845 = vsub.f32 %v1773, %v1844
      %v1846 = vand.u32 %v1845, 4294901760
      %v1847 = vsub.f32 %v1845, %v1846
      %v1848 = vand.u32 %v1847, 4294901760
      %1849 = vmatmul.mubr.f32.gmra.mxu0 %v1848
      %v1850 = vpop.f32.mrf.mxu0
      %v1851 = vadd.f32 0.0, %v1850
      %v1852 = vpop.f32.mrf.mxu0
      %1853 = vdwg.mxu0
      %1854 = vmatprep.subr.mxu0 0.0
      %1855 = vmatpush1.msra.mxu0 0.0
      %1856 = vmatprep.subr.mxu0 0.0
      %1857 = vmatpush1.msra.mxu0 0.0
      %1858 = vmatprep.subr.mxu0 0.0
      %1859 = vmatpush1.msra.mxu0 0.0
      %1860 = vmatprep.subr.mxu0 0.0
      %1861 = vmatpush1.msra.mxu0 0.0
      %1862 = vmatprep.subr.mxu0 0.0
      %1863 = vmatpush1.msra.mxu0 0.0
      %1864 = vmatprep.subr.mxu0 0.0
      %1865 = vmatpush1.msra.mxu0 0.0
      %1866 = vmatprep.subr.mxu0 0.0
      %1867 = vmatpush1.msra.mxu0 0.0
      %1868 = vmatprep.subr.mxu0 0.0
      %1869 = vmatpush1.msra.mxu0 0.0
      %1870 = vmatprep.subr.mxu0 0.0
      %1871 = vmatpush1.msra.mxu0 0.0
      %1872 = vmatprep.subr.mxu0 0.0
      %1873 = vmatpush1.msra.mxu0 0.0
      %1874 = vmatprep.subr.mxu0 0.0
      %1875 = vmatpush1.msra.mxu0 0.0
      %1876 = vmatprep.subr.mxu0 0.0
      %1877 = vmatpush1.msra.mxu0 0.0
      %1878 = vmatprep.subr.mxu0 0.0
      %1879 = vmatpush1.msra.mxu0 0.0
      %1880 = vmatprep.subr.mxu0 0.0
      %1881 = vmatpush1.msra.mxu0 0.0
      %1882 = vmatprep.subr.mxu0 0.0
      %1883 = vmatpush1.msra.mxu0 0.0
      %1884 = vmatprep.subr.mxu0 0.0
      %v1885 = vand.u32 %v1776, 4294901760
      %v1886 = vsub.f32 %v1776, %v1885
      %v1887 = vand.u32 %v1886, 4294901760
      %v1888 = vsub.f32 %v1886, %v1887
      %v1889 = vand.u32 %v1888, 4294901760
      %1890 = vmatpush1.msra.mxu0 %v1889
      %1891 = vmatprep.subr.mxu0 0.0
      %1892 = vmatpush2.msra.mxu0 0.0
      %1893 = vmatprep.subr.mxu0 0.0
      %1894 = vmatpush2.msra.mxu0 0.0
      %1895 = vmatprep.subr.mxu0 0.0
      %1896 = vmatpush2.msra.mxu0 0.0
      %1897 = vmatprep.subr.mxu0 0.0
      %1898 = vmatpush2.msra.mxu0 0.0
      %1899 = vmatprep.subr.mxu0 0.0
      %1900 = vmatpush2.msra.mxu0 0.0
      %1901 = vmatprep.subr.mxu0 0.0
      %1902 = vmatpush2.msra.mxu0 0.0
      %1903 = vmatprep.subr.mxu0 0.0
      %1904 = vmatpush2.msra.mxu0 0.0
      %1905 = vmatprep.subr.mxu0 0.0
      %1906 = vmatpush2.msra.mxu0 0.0
      %1907 = vmatprep.subr.mxu0 0.0
      %1908 = vmatpush2.msra.mxu0 0.0
      %1909 = vmatprep.subr.mxu0 0.0
      %1910 = vmatpush2.msra.mxu0 0.0
      %1911 = vmatprep.subr.mxu0 0.0
      %1912 = vmatpush2.msra.mxu0 0.0
      %1913 = vmatprep.subr.mxu0 0.0
      %1914 = vmatpush2.msra.mxu0 0.0
      %1915 = vmatprep.subr.mxu0 0.0
      %1916 = vmatpush2.msra.mxu0 0.0
      %1917 = vmatprep.subr.mxu0 0.0
      %1918 = vmatpush2.msra.mxu0 0.0
      %1919 = vmatprep.subr.mxu0 0.0
      %1920 = vmatpush2.msra.mxu0 0.0
      %1921 = vmatprep.subr.mxu0 0.0
      %1922 = vmatpush2.msra.mxu0 0.0
      %1923 = vmatprep.mubr.f32.mxu0 0.0
      %v1924 = vand.u32 %v1773, 4294901760
      %1925 = vmatmul.mubr.f32.gmra.mxu0 %v1924
      %v1926 = vpop.f32.mrf.mxu0
      %v1927 = vadd.f32 %v1851, %v1926
      %v1928 = vpop.f32.mrf.mxu0
      %1929 = vdwg.mxu0
      %1930 = vmatprep.subr.mxu0 0.0
      %1931 = vmatpush1.msra.mxu0 0.0
      %1932 = vmatprep.subr.mxu0 0.0
      %1933 = vmatpush1.msra.mxu0 0.0
      %1934 = vmatprep.subr.mxu0 0.0
      %1935 = vmatpush1.msra.mxu0 0.0
      %1936 = vmatprep.subr.mxu0 0.0
      %1937 = vmatpush1.msra.mxu0 0.0
      %1938 = vmatprep.subr.mxu0 0.0
      %1939 = vmatpush1.msra.mxu0 0.0
      %1940 = vmatprep.subr.mxu0 0.0
      %1941 = vmatpush1.msra.mxu0 0.0
      %1942 = vmatprep.subr.mxu0 0.0
      %1943 = vmatpush1.msra.mxu0 0.0
      %1944 = vmatprep.subr.mxu0 0.0
      %1945 = vmatpush1.msra.mxu0 0.0
      %1946 = vmatprep.subr.mxu0 0.0
      %1947 = vmatpush1.msra.mxu0 0.0
      %1948 = vmatprep.subr.mxu0 0.0
      %1949 = vmatpush1.msra.mxu0 0.0
      %1950 = vmatprep.subr.mxu0 0.0
      %1951 = vmatpush1.msra.mxu0 0.0
      %1952 = vmatprep.subr.mxu0 0.0
      %1953 = vmatpush1.msra.mxu0 0.0
      %1954 = vmatprep.subr.mxu0 0.0
      %1955 = vmatpush1.msra.mxu0 0.0
      %1956 = vmatprep.subr.mxu0 0.0
      %1957 = vmatpush1.msra.mxu0 0.0
      %1958 = vmatprep.subr.mxu0 0.0
      %1959 = vmatpush1.msra.mxu0 0.0
      %1960 = vmatprep.subr.mxu0 0.0
      %v1961 = vand.u32 %v1776, 4294901760
      %v1962 = vsub.f32 %v1776, %v1961
      %1963 = vmatpush1.msra.mxu0 %v1962
      %1964 = vmatprep.subr.mxu0 0.0
      %1965 = vmatpush2.msra.mxu0 0.0
      %1966 = vmatprep.subr.mxu0 0.0
      %1967 = vmatpush2.msra.mxu0 0.0
      %1968 = vmatprep.subr.mxu0 0.0
      %1969 = vmatpush2.msra.mxu0 0.0
      %1970 = vmatprep.subr.mxu0 0.0
      %1971 = vmatpush2.msra.mxu0 0.0
      %1972 = vmatprep.subr.mxu0 0.0
      %1973 = vmatpush2.msra.mxu0 0.0
      %1974 = vmatprep.subr.mxu0 0.0
      %1975 = vmatpush2.msra.mxu0 0.0
      %1976 = vmatprep.subr.mxu0 0.0
      %1977 = vmatpush2.msra.mxu0 0.0
      %1978 = vmatprep.subr.mxu0 0.0
      %1979 = vmatpush2.msra.mxu0 0.0
      %1980 = vmatprep.subr.mxu0 0.0
      %1981 = vmatpush2.msra.mxu0 0.0
      %1982 = vmatprep.subr.mxu0 0.0
      %1983 = vmatpush2.msra.mxu0 0.0
      %1984 = vmatprep.subr.mxu0 0.0
      %1985 = vmatpush2.msra.mxu0 0.0
      %1986 = vmatprep.subr.mxu0 0.0
      %1987 = vmatpush2.msra.mxu0 0.0
      %1988 = vmatprep.subr.mxu0 0.0
      %1989 = vmatpush2.msra.mxu0 0.0
      %1990 = vmatprep.subr.mxu0 0.0
      %1991 = vmatpush2.msra.mxu0 0.0
      %1992 = vmatprep.subr.mxu0 0.0
      %1993 = vmatpush2.msra.mxu0 0.0
      %1994 = vmatprep.subr.mxu0 0.0
      %1995 = vmatpush2.msra.mxu0 0.0
      %1996 = vmatprep.mubr.f32.mxu0 0.0
      %v1997 = vand.u32 %v1773, 4294901760
      %v1998 = vsub.f32 %v1773, %v1997
      %1999 = vmatmul.mubr.f32.gmra.mxu0 %v1998
      %v2000 = vpop.f32.mrf.mxu0
      %v2001 = vadd.f32 %v1927, %v2000
      %v2002 = vpop.f32.mrf.mxu0
      %2003 = vdwg.mxu0
      %2004 = vmatprep.subr.mxu0 0.0
      %2005 = vmatpush1.msra.mxu0 0.0
      %2006 = vmatprep.subr.mxu0 0.0
      %2007 = vmatpush1.msra.mxu0 0.0
      %2008 = vmatprep.subr.mxu0 0.0
      %2009 = vmatpush1.msra.mxu0 0.0
      %2010 = vmatprep.subr.mxu0 0.0
      %2011 = vmatpush1.msra.mxu0 0.0
      %2012 = vmatprep.subr.mxu0 0.0
      %2013 = vmatpush1.msra.mxu0 0.0
      %2014 = vmatprep.subr.mxu0 0.0
      %2015 = vmatpush1.msra.mxu0 0.0
      %2016 = vmatprep.subr.mxu0 0.0
      %2017 = vmatpush1.msra.mxu0 0.0
      %2018 = vmatprep.subr.mxu0 0.0
      %2019 = vmatpush1.msra.mxu0 0.0
      %2020 = vmatprep.subr.mxu0 0.0
      %2021 = vmatpush1.msra.mxu0 0.0
      %2022 = vmatprep.subr.mxu0 0.0
      %2023 = vmatpush1.msra.mxu0 0.0
      %2024 = vmatprep.subr.mxu0 0.0
      %2025 = vmatpush1.msra.mxu0 0.0
      %2026 = vmatprep.subr.mxu0 0.0
      %2027 = vmatpush1.msra.mxu0 0.0
      %2028 = vmatprep.subr.mxu0 0.0
      %2029 = vmatpush1.msra.mxu0 0.0
      %2030 = vmatprep.subr.mxu0 0.0
      %2031 = vmatpush1.msra.mxu0 0.0
      %2032 = vmatprep.subr.mxu0 0.0
      %2033 = vmatpush1.msra.mxu0 0.0
      %2034 = vmatprep.subr.mxu0 0.0
      %v2035 = vand.u32 %v1776, 4294901760
      %2036 = vmatpush1.msra.mxu0 %v2035
      %2037 = vmatprep.subr.mxu0 0.0
      %2038 = vmatpush2.msra.mxu0 0.0
      %2039 = vmatprep.subr.mxu0 0.0
      %2040 = vmatpush2.msra.mxu0 0.0
      %2041 = vmatprep.subr.mxu0 0.0
      %2042 = vmatpush2.msra.mxu0 0.0
      %2043 = vmatprep.subr.mxu0 0.0
      %2044 = vmatpush2.msra.mxu0 0.0
      %2045 = vmatprep.subr.mxu0 0.0
      %2046 = vmatpush2.msra.mxu0 0.0
      %2047 = vmatprep.subr.mxu0 0.0
      %2048 = vmatpush2.msra.mxu0 0.0
      %2049 = vmatprep.subr.mxu0 0.0
      %2050 = vmatpush2.msra.mxu0 0.0
      %2051 = vmatprep.subr.mxu0 0.0
      %2052 = vmatpush2.msra.mxu0 0.0
      %2053 = vmatprep.subr.mxu0 0.0
      %2054 = vmatpush2.msra.mxu0 0.0
      %2055 = vmatprep.subr.mxu0 0.0
      %2056 = vmatpush2.msra.mxu0 0.0
      %2057 = vmatprep.subr.mxu0 0.0
      %2058 = vmatpush2.msra.mxu0 0.0
      %2059 = vmatprep.subr.mxu0 0.0
      %2060 = vmatpush2.msra.mxu0 0.0
      %2061 = vmatprep.subr.mxu0 0.0
      %2062 = vmatpush2.msra.mxu0 0.0
      %2063 = vmatprep.subr.mxu0 0.0
      %2064 = vmatpush2.msra.mxu0 0.0
      %2065 = vmatprep.subr.mxu0 0.0
      %2066 = vmatpush2.msra.mxu0 0.0
      %2067 = vmatprep.subr.mxu0 0.0
      %2068 = vmatpush2.msra.mxu0 0.0
      %2069 = vmatprep.mubr.f32.mxu0 0.0
      %v2070 = vand.u32 %v1773, 4294901760
      %v2071 = vsub.f32 %v1773, %v2070
      %v2072 = vand.u32 %v2071, 4294901760
      %2073 = vmatmul.mubr.f32.gmra.mxu0 %v2072
      %v2074 = vpop.f32.mrf.mxu0
      %v2075 = vadd.f32 %v2001, %v2074
      %v2076 = vpop.f32.mrf.mxu0
      %2077 = vdwg.mxu0
      %2078 = vmatprep.subr.mxu0 0.0
      %2079 = vmatpush1.msra.mxu0 0.0
      %2080 = vmatprep.subr.mxu0 0.0
      %2081 = vmatpush1.msra.mxu0 0.0
      %2082 = vmatprep.subr.mxu0 0.0
      %2083 = vmatpush1.msra.mxu0 0.0
      %2084 = vmatprep.subr.mxu0 0.0
      %2085 = vmatpush1.msra.mxu0 0.0
      %2086 = vmatprep.subr.mxu0 0.0
      %2087 = vmatpush1.msra.mxu0 0.0
      %2088 = vmatprep.subr.mxu0 0.0
      %2089 = vmatpush1.msra.mxu0 0.0
      %2090 = vmatprep.subr.mxu0 0.0
      %2091 = vmatpush1.msra.mxu0 0.0
      %2092 = vmatprep.subr.mxu0 0.0
      %2093 = vmatpush1.msra.mxu0 0.0
      %2094 = vmatprep.subr.mxu0 0.0
      %2095 = vmatpush1.msra.mxu0 0.0
      %2096 = vmatprep.subr.mxu0 0.0
      %2097 = vmatpush1.msra.mxu0 0.0
      %2098 = vmatprep.subr.mxu0 0.0
      %2099 = vmatpush1.msra.mxu0 0.0
      %2100 = vmatprep.subr.mxu0 0.0
      %2101 = vmatpush1.msra.mxu0 0.0
      %2102 = vmatprep.subr.mxu0 0.0
      %2103 = vmatpush1.msra.mxu0 0.0
      %2104 = vmatprep.subr.mxu0 0.0
      %2105 = vmatpush1.msra.mxu0 0.0
      %2106 = vmatprep.subr.mxu0 0.0
      %2107 = vmatpush1.msra.mxu0 0.0
      %2108 = vmatprep.subr.mxu0 0.0
      %v2109 = vand.u32 %v1776, 4294901760
      %v2110 = vsub.f32 %v1776, %v2109
      %v2111 = vand.u32 %v2110, 4294901760
      %2112 = vmatpush1.msra.mxu0 %v2111
      %2113 = vmatprep.subr.mxu0 0.0
      %2114 = vmatpush2.msra.mxu0 0.0
      %2115 = vmatprep.subr.mxu0 0.0
      %2116 = vmatpush2.msra.mxu0 0.0
      %2117 = vmatprep.subr.mxu0 0.0
      %2118 = vmatpush2.msra.mxu0 0.0
      %2119 = vmatprep.subr.mxu0 0.0
      %2120 = vmatpush2.msra.mxu0 0.0
      %2121 = vmatprep.subr.mxu0 0.0
      %2122 = vmatpush2.msra.mxu0 0.0
      %2123 = vmatprep.subr.mxu0 0.0
      %2124 = vmatpush2.msra.mxu0 0.0
      %2125 = vmatprep.subr.mxu0 0.0
      %2126 = vmatpush2.msra.mxu0 0.0
      %2127 = vmatprep.subr.mxu0 0.0
      %2128 = vmatpush2.msra.mxu0 0.0
      %2129 = vmatprep.subr.mxu0 0.0
      %2130 = vmatpush2.msra.mxu0 0.0
      %2131 = vmatprep.subr.mxu0 0.0
      %2132 = vmatpush2.msra.mxu0 0.0
      %2133 = vmatprep.subr.mxu0 0.0
      %2134 = vmatpush2.msra.mxu0 0.0
      %2135 = vmatprep.subr.mxu0 0.0
      %2136 = vmatpush2.msra.mxu0 0.0
      %2137 = vmatprep.subr.mxu0 0.0
      %2138 = vmatpush2.msra.mxu0 0.0
      %2139 = vmatprep.subr.mxu0 0.0
      %2140 = vmatpush2.msra.mxu0 0.0
      %2141 = vmatprep.subr.mxu0 0.0
      %2142 = vmatpush2.msra.mxu0 0.0
      %2143 = vmatprep.subr.mxu0 0.0
      %2144 = vmatpush2.msra.mxu0 0.0
      %2145 = vmatprep.mubr.f32.mxu0 0.0
      %v2146 = vand.u32 %v1773, 4294901760
      %2147 = vmatmul.mubr.f32.gmra.mxu0 %v2146
      %v2148 = vpop.f32.mrf.mxu0
      %v2149 = vadd.f32 %v2075, %v2148
      %v2150 = vpop.f32.mrf.mxu0
      %2151 = vdwg.mxu0
      %2152 = vmatprep.subr.mxu0 0.0
      %2153 = vmatpush1.msra.mxu0 0.0
      %2154 = vmatprep.subr.mxu0 0.0
      %2155 = vmatpush1.msra.mxu0 0.0
      %2156 = vmatprep.subr.mxu0 0.0
      %2157 = vmatpush1.msra.mxu0 0.0
      %2158 = vmatprep.subr.mxu0 0.0
      %2159 = vmatpush1.msra.mxu0 0.0
      %2160 = vmatprep.subr.mxu0 0.0
      %2161 = vmatpush1.msra.mxu0 0.0
      %2162 = vmatprep.subr.mxu0 0.0
      %2163 = vmatpush1.msra.mxu0 0.0
      %2164 = vmatprep.subr.mxu0 0.0
      %2165 = vmatpush1.msra.mxu0 0.0
      %2166 = vmatprep.subr.mxu0 0.0
      %2167 = vmatpush1.msra.mxu0 0.0
      %2168 = vmatprep.subr.mxu0 0.0
      %2169 = vmatpush1.msra.mxu0 0.0
      %2170 = vmatprep.subr.mxu0 0.0
      %2171 = vmatpush1.msra.mxu0 0.0
      %2172 = vmatprep.subr.mxu0 0.0
      %2173 = vmatpush1.msra.mxu0 0.0
      %2174 = vmatprep.subr.mxu0 0.0
      %2175 = vmatpush1.msra.mxu0 0.0
      %2176 = vmatprep.subr.mxu0 0.0
      %2177 = vmatpush1.msra.mxu0 0.0
      %2178 = vmatprep.subr.mxu0 0.0
      %2179 = vmatpush1.msra.mxu0 0.0
      %2180 = vmatprep.subr.mxu0 0.0
      %2181 = vmatpush1.msra.mxu0 0.0
      %2182 = vmatprep.subr.mxu0 0.0
      %v2183 = vand.u32 %v1776, 4294901760
      %2184 = vmatpush1.msra.mxu0 %v2183
      %2185 = vmatprep.subr.mxu0 0.0
      %2186 = vmatpush2.msra.mxu0 0.0
      %2187 = vmatprep.subr.mxu0 0.0
      %2188 = vmatpush2.msra.mxu0 0.0
      %2189 = vmatprep.subr.mxu0 0.0
      %2190 = vmatpush2.msra.mxu0 0.0
      %2191 = vmatprep.subr.mxu0 0.0
      %2192 = vmatpush2.msra.mxu0 0.0
      %2193 = vmatprep.subr.mxu0 0.0
      %2194 = vmatpush2.msra.mxu0 0.0
      %2195 = vmatprep.subr.mxu0 0.0
      %2196 = vmatpush2.msra.mxu0 0.0
      %2197 = vmatprep.subr.mxu0 0.0
      %2198 = vmatpush2.msra.mxu0 0.0
      %2199 = vmatprep.subr.mxu0 0.0
      %2200 = vmatpush2.msra.mxu0 0.0
      %2201 = vmatprep.subr.mxu0 0.0
      %2202 = vmatpush2.msra.mxu0 0.0
      %2203 = vmatprep.subr.mxu0 0.0
      %2204 = vmatpush2.msra.mxu0 0.0
      %2205 = vmatprep.subr.mxu0 0.0
      %2206 = vmatpush2.msra.mxu0 0.0
      %2207 = vmatprep.subr.mxu0 0.0
      %2208 = vmatpush2.msra.mxu0 0.0
      %2209 = vmatprep.subr.mxu0 0.0
      %2210 = vmatpush2.msra.mxu0 0.0
      %2211 = vmatprep.subr.mxu0 0.0
      %2212 = vmatpush2.msra.mxu0 0.0
      %2213 = vmatprep.subr.mxu0 0.0
      %2214 = vmatpush2.msra.mxu0 0.0
      %2215 = vmatprep.subr.mxu0 0.0
      %2216 = vmatpush2.msra.mxu0 0.0
      %2217 = vmatprep.mubr.f32.mxu0 0.0
      %v2218 = vand.u32 %v1773, 4294901760
      %2219 = vmatmul.mubr.f32.gmra.mxu0 %v2218
      %v2220 = vpop.f32.mrf.mxu0
      %v2221 = vadd.f32 %v2149, %v2220
      %v2222 = vpop.f32.mrf.mxu0
      %2223 = vdwg.mxu0
      %vm2224 = vcmask 64512
      %2225 = vst.msk [vmem:[%s234] sm:$0xff] %vm2224, %v2221
      %p2226 = scmp.lt.s32.totalorder %s19, 1
      %s2227 = scalar_select %p2226, %s19, 1
      %p2228 = scmp.lt.s32.totalorder %s20, 0
      %s2229 = scalar_select %p2228, %s20, 0
      %s2230 = sadd.s32 %s2229, %s2227
      %s2231 = smul.addr %s2230, 8
      %s2232 = scalar_lea.vmem %s4, %s2231
      // Predicated region
      $region37: #{efficient_conv3d_block_pallas.2} parent=35 // pred_check
        %p2233 = pneg %p138
      $region38: #{efficient_conv3d_block_pallas.2} parent=35 // pred_check_branch
        %2235 = sbr.rel (%p2233) target = $region40
      $region39: #{efficient_conv3d_block_pallas.2} parent=35 // pred_region
        _
      $region40: #{efficient_conv3d_block_pallas.2} parent=35 // pred_fallthru
        _
    $region36: #{efficient_conv3d_block_pallas.2} parent=5 // pred_fallthru
      _
    %p2236 = scmp.le.s32.totalorder 2, %s10
    // Predicated region
    $region41: #{efficient_conv3d_block_pallas.2} parent=5 // pred_check
      %p2237 = pneg %p2236
    $region42: #{efficient_conv3d_block_pallas.2} parent=5 // pred_check_branch
      %2239 = sbr.rel (%p2237) target = $region44
    $region43: #{efficient_conv3d_block_pallas.2} parent=5 // pred_region
      %s2240 = ssub.s32 %s10, 2
      // Predicated region
      $region45: #{efficient_conv3d_block_pallas.2} parent=43 // pred_check
        %p2241 = pneg %p144
      $region46: #{efficient_conv3d_block_pallas.2} parent=43 // pred_check_branch
        %2243 = sbr.rel (%p2241) target = $region48
      $region47: #{efficient_conv3d_block_pallas.2} parent=43 // pred_region
        %p2244 = scmp.lt.s32.totalorder %s21, 1
        %s2245 = scalar_select %p2244, %s21, 1
        %p2246 = scmp.lt.s32.totalorder %s22, 0
        %s2247 = scalar_select %p2246, %s22, 0
        %s2248 = sadd.s32 %s2247, %s2245
        %s2249 = smul.addr %s2248, 8
        %s2250 = scalar_lea.vmem %s4, %s2249
      $region48: #{efficient_conv3d_block_pallas.2} parent=43 // pred_fallthru
        _
    $region44: #{efficient_conv3d_block_pallas.2} parent=5 // pred_fallthru
      _
  $region6: #{efficient_conv3d_block_pallas.2} parent=0 // loop_footer
    %s14 = sadd.s32 1, %s10
  $region7: #{efficient_conv3d_block_pallas.2} parent=0 // loop_footer_branch
    %9 = sbr.rel target = $region3
  $region8: #{efficient_conv3d_block_pallas.2} parent=0 // loop_exit
    _

</llo_original>
